<compile_context>
chip_gen: v7x
topology: tpu7x:2x2x1
jax: 0.10.0
libtpu: 0.0.40
codegen_flags: <defaults>
</compile_context>

<pallas_src>
import math
import functools

import jax
import jax.numpy as jnp
from jax import lax
from jax.experimental import pallas as pl
from jax.experimental.pallas import tpu as pltpu


def _mha_kernel(q_in_ref, k_in_ref, v_in_ref,
                wq_ref, wk_ref, wv_ref,
                bq_ref, bk_ref, bv_ref,
                mask_ref, o_ref,
                *, heads_num, head_size):
    # Block views (one batch element per grid step):
    #   q_in/k_in/v_in : (1, S, input_size)
    #   w*             : (input_size, H*head_size)   -- resident across the grid
    #   b*             : (1, H*head_size)
    #   mask           : (1, 1, S, S)                 -- additive mask
    #   o              : (1, S, H*head_size)          -- lane-dense, final layout
    xq = q_in_ref[0]                      # [S, input_size]
    xk = k_in_ref[0]
    xv = v_in_ref[0]

    scale = 1.0 / math.sqrt(float(head_size))

    # Fused projections for ALL heads at once (N = H*head_size on the MXU).
    # The softmax scale is folded into q (cheaper than scaling H [S, S] scores).
    q = (jnp.dot(xq, wq_ref[...], preferred_element_type=jnp.float32)
         + bq_ref[...]) * scale                                        # [S, H*hd]
    k = jnp.dot(xk, wk_ref[...], preferred_element_type=jnp.float32) + bk_ref[...]
    v = jnp.dot(xv, wv_ref[...], preferred_element_type=jnp.float32) + bv_ref[...]

    m = mask_ref[0, 0]                                                 # [S, S]

    # Per-head attention.  heads_num is small & static -> unrolled Python loop;
    # one lane-dense store of the concatenated [S, H*hd] result at the end.
    outs = []
    for h in range(heads_num):
        lo = h * head_size
        q_h = q[:, lo:lo + head_size]     # static lane-slices of register values
        k_h = k[:, lo:lo + head_size]
        v_h = v[:, lo:lo + head_size]

        # q_h @ k_h^T without materializing a transpose: contract last axes.
        scores = lax.dot_general(
            q_h, k_h,
            dimension_numbers=(((1,), (1,)), ((), ())),
            preferred_element_type=jnp.float32) + m                    # [S, S]

        # Numerically stable softmax with the normalization deferred until
        # AFTER the PV matmul (scales [S, hd] instead of [S, S]); the
        # reciprocal runs on the EUP slot.
        mx = jnp.max(scores, axis=-1, keepdims=True)
        e = jnp.exp(scores - mx)                                       # [S, S]
        inv_denom = pl.reciprocal(jnp.sum(e, axis=-1, keepdims=True),
                                  approx=True)                         # [S, 1]
        ctx = jnp.dot(e, v_h, preferred_element_type=jnp.float32)      # [S, hd]
        outs.append(ctx * inv_denom)

    out = jnp.concatenate(outs, axis=-1)                               # [S, H*hd]
    o_ref[0] = out.astype(o_ref.dtype)


def multi_headed_attention(key, value, query, wq, bq, wk, bk, wv, bv, mask,
                           *, heads_num, head_size):
    """key/value/query: [B, S, input_size]; w*: [H*hd, input_size] (torch Linear
    layout); b*: [H*hd]; mask: [B, 1, S, S] (additive). Returns [B, S, H*hd]."""
    B, S, input_size = key.shape
    HD = heads_num * head_size

    # torch Linear: y = x @ W.T + b with W [H*hd, in].  After the transpose,
    # head h owns output columns [h*hd, (h+1)*hd) — exactly what the kernel slices.
    wq_t, wk_t, wv_t = wq.T, wk.T, wv.T                 # [in, H*hd]
    bq_2 = bq.reshape(1, HD)
    bk_2 = bk.reshape(1, HD)
    bv_2 = bv.reshape(1, HD)

    kernel = functools.partial(_mha_kernel, heads_num=heads_num, head_size=head_size)

    x_spec = pl.BlockSpec((1, S, input_size), lambda b: (b, 0, 0))
    w_spec = pl.BlockSpec((input_size, HD), lambda b: (0, 0))   # constant index -> fetched once
    b_spec = pl.BlockSpec((1, HD), lambda b: (0, 0))
    m_spec = pl.BlockSpec((1, 1, S, S), lambda b: (b, 0, 0, 0))
    o_spec = pl.BlockSpec((1, S, HD), lambda b: (b, 0, 0))

    return pl.pallas_call(
        kernel,
        out_shape=jax.ShapeDtypeStruct((B, S, HD), query.dtype),
        grid_spec=pltpu.PrefetchScalarGridSpec(
            num_scalar_prefetch=0,
            grid=(B,),                                    # B >= 2 -> both v7x TCs busy
            in_specs=[x_spec, x_spec, x_spec,             # query, key, value inputs
                      w_spec, w_spec, w_spec,             # Wq, Wk, Wv (transposed)
                      b_spec, b_spec, b_spec,             # bq, bk, bv
                      m_spec],                            # additive mask
            out_specs=o_spec,
        ),
        compiler_params=pltpu.CompilerParams(
            dimension_semantics=("parallel",)),
    )(query, key, value, wq_t, wk_t, wv_t, bq_2, bk_2, bv_2, mask)


def _reference(key, value, query, wq, bq, wk, bk, wv, bv, mask,
               *, heads_num, head_size):
    """Pure-JAX reference mirroring the PyTorch forward exactly."""
    B, S, _ = key.shape

    def proj(x, w, b):
        y = x @ w.T + b                                   # [B, S, H*hd]
        return y.reshape(B, S, heads_num, head_size).transpose(0, 2, 1, 3)  # [B,H,S,hd]

    q = proj(query, wq, bq)
    k = proj(key, wk, bk)
    v = proj(value, wv, bv)
    scores = jnp.einsum('bhqd,bhkd->bhqk', q, k) / math.sqrt(float(head_size))
    scores = scores + mask
    probs = jax.nn.softmax(scores, axis=-1)
    out = jnp.einsum('bhqk,bhkd->bhqd', probs, v)
    return out.transpose(0, 2, 1, 3).reshape(B, S, heads_num * head_size)


if __name__ == "__main__":
    # Small but TPU-friendly shapes: H*hd = 128 keeps the output store a full
    # 128-lane unmasked `vst` (lane-dense out_spec is the biggest single lever).
    B, S = 2, 16
    input_size = 64
    heads_num = 4
    head_size = 32

    root = jax.random.PRNGKey(0)
    keys = jax.random.split(root, 10)

    # Inputs (key, value, query share hidden size = input_size).
    k_in = jax.random.normal(keys[0], (B, S, input_size), dtype=jnp.float32)
    v_in = jax.random.normal(keys[1], (B, S, input_size), dtype=jnp.float32)
    q_in = jax.random.normal(keys[2], (B, S, input_size), dtype=jnp.float32)
    mask = jax.random.normal(keys[3], (B, 1, S, S), dtype=jnp.float32)

    # Deterministic parameter init (torch Linear shapes: W [H*hd, in], b [H*hd]).
    bound = 1.0 / math.sqrt(input_size)
    def uni(k, shape):
        return jax.random.uniform(k, shape, jnp.float32, minval=-bound, maxval=bound)

    wq = uni(keys[4], (heads_num * head_size, input_size))
    wk = uni(keys[5], (heads_num * head_size, input_size))
    wv = uni(keys[6], (heads_num * head_size, input_size))
    bq = uni(keys[7], (heads_num * head_size,))
    bk = uni(keys[8], (heads_num * head_size,))
    bv = uni(keys[9], (heads_num * head_size,))

    out = multi_headed_attention(k_in, v_in, q_in, wq, bq, wk, bk, wv, bv, mask,
                                 heads_num=heads_num, head_size=head_size)
    out = jax.block_until_ready(out)

    ref = _reference(k_in, v_in, q_in, wq, bq, wk, bk, wv, bv, mask,
                     heads_num=heads_num, head_size=head_size)
    assert out.shape == (B, S, heads_num * head_size)
    # Slightly relaxed tolerance: the softmax denominator uses the EUP approx
    # reciprocal (pl.reciprocal(approx=True)) and normalization is deferred
    # past the PV matmul; everything else is exact f32.
    assert jnp.allclose(out, ref, atol=2e-3, rtol=2e-3), "mismatch vs reference"

    print("KERNEL_OK")
</pallas_src>

<mosaic_0001>
module attributes {stable_mosaic.version = 11 : i64} {
  func.func @_mha_kernel(%arg0: i32, %arg1: memref<1x16x64xf32, #tpu.memory_space<vmem>>, %arg2: memref<1x16x64xf32, #tpu.memory_space<vmem>>, %arg3: memref<1x16x64xf32, #tpu.memory_space<vmem>>, %arg4: memref<64x128xf32, #tpu.memory_space<vmem>>, %arg5: memref<64x128xf32, #tpu.memory_space<vmem>>, %arg6: memref<64x128xf32, #tpu.memory_space<vmem>>, %arg7: memref<1x128xf32, #tpu.memory_space<vmem>>, %arg8: memref<1x128xf32, #tpu.memory_space<vmem>>, %arg9: memref<1x128xf32, #tpu.memory_space<vmem>>, %arg10: memref<1x1x16x16xf32, #tpu.memory_space<vmem>>, %arg11: memref<1x16x128xf32, #tpu.memory_space<vmem>>) attributes {dimension_semantics = [#tpu.dimension_semantics<parallel>], iteration_bounds = array<i64: 2>, scalar_prefetch = 0 : i64, scratch_operands = 0 : i64, tpu.core_type = #tpu.core_type<tc>, window_params = [{transform_indices = @transform_0, window_bounds = array<i64: 1, 16, 64>}, {transform_indices = @transform_1, window_bounds = array<i64: 1, 16, 64>}, {transform_indices = @transform_2, window_bounds = array<i64: 1, 16, 64>}, {pipeline_mode = #tpu.pipeline_mode<synchronous>, transform_indices = @transform_3, window_bounds = array<i64: 64, 128>}, {pipeline_mode = #tpu.pipeline_mode<synchronous>, transform_indices = @transform_4, window_bounds = array<i64: 64, 128>}, {pipeline_mode = #tpu.pipeline_mode<synchronous>, transform_indices = @transform_5, window_bounds = array<i64: 64, 128>}, {pipeline_mode = #tpu.pipeline_mode<synchronous>, transform_indices = @transform_6, window_bounds = array<i64: 1, 128>}, {pipeline_mode = #tpu.pipeline_mode<synchronous>, transform_indices = @transform_7, window_bounds = array<i64: 1, 128>}, {pipeline_mode = #tpu.pipeline_mode<synchronous>, transform_indices = @transform_8, window_bounds = array<i64: 1, 128>}, {transform_indices = @transform_9, window_bounds = array<i64: 1, 1, 16, 16>}, {transform_indices = @transform_10, window_bounds = array<i64: 1, 16, 128>}]} {
    %c0 = arith.constant 0 : index
    %c0_0 = arith.constant 0 : index
    %c0_1 = arith.constant 0 : index
    %0 = vector.load %arg1[%c0, %c0_0, %c0_1] : memref<1x16x64xf32, #tpu.memory_space<vmem>>, vector<1x16x64xf32>
    %1 = vector.shape_cast %0 : vector<1x16x64xf32> to vector<16x64xf32>
    %c0_2 = arith.constant 0 : index
    %c0_3 = arith.constant 0 : index
    %c0_4 = arith.constant 0 : index
    %2 = vector.load %arg2[%c0_2, %c0_3, %c0_4] : memref<1x16x64xf32, #tpu.memory_space<vmem>>, vector<1x16x64xf32>
    %3 = vector.shape_cast %2 : vector<1x16x64xf32> to vector<16x64xf32>
    %c0_5 = arith.constant 0 : index
    %c0_6 = arith.constant 0 : index
    %c0_7 = arith.constant 0 : index
    %4 = vector.load %arg3[%c0_5, %c0_6, %c0_7] : memref<1x16x64xf32, #tpu.memory_space<vmem>>, vector<1x16x64xf32>
    %5 = vector.shape_cast %4 : vector<1x16x64xf32> to vector<16x64xf32>
    %c0_8 = arith.constant 0 : index
    %c0_9 = arith.constant 0 : index
    %6 = vector.load %arg4[%c0_8, %c0_9] : memref<64x128xf32, #tpu.memory_space<vmem>>, vector<64x128xf32>
    %cst = arith.constant dense<0.000000e+00> : vector<16x128xf32>
    %7 = tpu.matmul %1, %6, %cst {dimension_numbers = #tpu.dot_dimension_numbers<[1], [0], [0], [1], [0, 0, 1, 1], [], []>} : vector<16x64xf32>, vector<64x128xf32>, vector<16x128xf32> -> vector<16x128xf32>
    %c0_10 = arith.constant 0 : index
    %c0_11 = arith.constant 0 : index
    %8 = vector.load %arg7[%c0_10, %c0_11] : memref<1x128xf32, #tpu.memory_space<vmem>>, vector<1x128xf32>
    %9 = vector.broadcast %8 : vector<1x128xf32> to vector<16x128xf32>
    %10 = arith.addf %7, %9 : vector<16x128xf32>
    %cst_12 = arith.constant 0.176776692 : f32
    %11 = vector.broadcast %cst_12 : f32 to vector<16x128xf32>
    %12 = arith.mulf %10, %11 : vector<16x128xf32>
    %c0_13 = arith.constant 0 : index
    %c0_14 = arith.constant 0 : index
    %13 = vector.load %arg5[%c0_13, %c0_14] : memref<64x128xf32, #tpu.memory_space<vmem>>, vector<64x128xf32>
    %cst_15 = arith.constant dense<0.000000e+00> : vector<16x128xf32>
    %14 = tpu.matmul %3, %13, %cst_15 {dimension_numbers = #tpu.dot_dimension_numbers<[1], [0], [0], [1], [0, 0, 1, 1], [], []>} : vector<16x64xf32>, vector<64x128xf32>, vector<16x128xf32> -> vector<16x128xf32>
    %c0_16 = arith.constant 0 : index
    %c0_17 = arith.constant 0 : index
    %15 = vector.load %arg8[%c0_16, %c0_17] : memref<1x128xf32, #tpu.memory_space<vmem>>, vector<1x128xf32>
    %16 = vector.broadcast %15 : vector<1x128xf32> to vector<16x128xf32>
    %17 = arith.addf %14, %16 : vector<16x128xf32>
    %c0_18 = arith.constant 0 : index
    %c0_19 = arith.constant 0 : index
    %18 = vector.load %arg6[%c0_18, %c0_19] : memref<64x128xf32, #tpu.memory_space<vmem>>, vector<64x128xf32>
    %cst_20 = arith.constant dense<0.000000e+00> : vector<16x128xf32>
    %19 = tpu.matmul %5, %18, %cst_20 {dimension_numbers = #tpu.dot_dimension_numbers<[1], [0], [0], [1], [0, 0, 1, 1], [], []>} : vector<16x64xf32>, vector<64x128xf32>, vector<16x128xf32> -> vector<16x128xf32>
    %c0_21 = arith.constant 0 : index
    %c0_22 = arith.constant 0 : index
    %20 = vector.load %arg9[%c0_21, %c0_22] : memref<1x128xf32, #tpu.memory_space<vmem>>, vector<1x128xf32>
    %21 = vector.broadcast %20 : vector<1x128xf32> to vector<16x128xf32>
    %22 = arith.addf %19, %21 : vector<16x128xf32>
    %c0_23 = arith.constant 0 : index
    %c0_24 = arith.constant 0 : index
    %c0_25 = arith.constant 0 : index
    %c0_26 = arith.constant 0 : index
    %23 = vector.load %arg10[%c0_23, %c0_24, %c0_25, %c0_26] : memref<1x1x16x16xf32, #tpu.memory_space<vmem>>, vector<1x1x16x16xf32>
    %24 = vector.shape_cast %23 : vector<1x1x16x16xf32> to vector<16x16xf32>
    %25 = vector.extract_strided_slice %12 {offsets = [0, 0], sizes = [16, 32], strides = [1, 1]} : vector<16x128xf32> to vector<16x32xf32>
    %26 = vector.extract_strided_slice %17 {offsets = [0, 0], sizes = [16, 32], strides = [1, 1]} : vector<16x128xf32> to vector<16x32xf32>
    %27 = vector.extract_strided_slice %22 {offsets = [0, 0], sizes = [16, 32], strides = [1, 1]} : vector<16x128xf32> to vector<16x32xf32>
    %cst_27 = arith.constant dense<0.000000e+00> : vector<16x16xf32>
    %28 = tpu.matmul %25, %26, %cst_27 {dimension_numbers = #tpu.dot_dimension_numbers<[1], [1], [0], [0], [0, 0, 1, 0], [], []>} : vector<16x32xf32>, vector<16x32xf32>, vector<16x16xf32> -> vector<16x16xf32>
    %29 = arith.addf %28, %24 : vector<16x16xf32>
    %cst_28 = arith.constant dense<0xFF800000> : vector<16xf32>
    %30 = vector.multi_reduction <maximumf>, %29, %cst_28 [1] : vector<16x16xf32> to vector<16xf32>
    %31 = vector.shape_cast %30 : vector<16xf32> to vector<16x1xf32>
    %32 = vector.broadcast %31 : vector<16x1xf32> to vector<16x16xf32>
    %33 = arith.subf %29, %32 : vector<16x16xf32>
    %34 = math.exp %33 : vector<16x16xf32>
    %cst_29 = arith.constant dense<0.000000e+00> : vector<16xf32>
    %35 = vector.multi_reduction <add>, %34, %cst_29 [1] : vector<16x16xf32> to vector<16xf32>
    %36 = vector.shape_cast %35 : vector<16xf32> to vector<16x1xf32>
    %37 = tpu.reciprocal %36 {approx = true} : vector<16x1xf32> -> vector<16x1xf32>
    %cst_30 = arith.constant dense<0.000000e+00> : vector<16x32xf32>
    %38 = tpu.matmul %34, %27, %cst_30 {dimension_numbers = #tpu.dot_dimension_numbers<[1], [0], [0], [1], [0, 0, 1, 1], [], []>} : vector<16x16xf32>, vector<16x32xf32>, vector<16x32xf32> -> vector<16x32xf32>
    %39 = vector.broadcast %37 : vector<16x1xf32> to vector<16x32xf32>
    %40 = arith.mulf %38, %39 : vector<16x32xf32>
    %41 = vector.extract_strided_slice %12 {offsets = [0, 32], sizes = [16, 32], strides = [1, 1]} : vector<16x128xf32> to vector<16x32xf32>
    %42 = vector.extract_strided_slice %17 {offsets = [0, 32], sizes = [16, 32], strides = [1, 1]} : vector<16x128xf32> to vector<16x32xf32>
    %43 = vector.extract_strided_slice %22 {offsets = [0, 32], sizes = [16, 32], strides = [1, 1]} : vector<16x128xf32> to vector<16x32xf32>
    %cst_31 = arith.constant dense<0.000000e+00> : vector<16x16xf32>
    %44 = tpu.matmul %41, %42, %cst_31 {dimension_numbers = #tpu.dot_dimension_numbers<[1], [1], [0], [0], [0, 0, 1, 0], [], []>} : vector<16x32xf32>, vector<16x32xf32>, vector<16x16xf32> -> vector<16x16xf32>
    %45 = arith.addf %44, %24 : vector<16x16xf32>
    %cst_32 = arith.constant dense<0xFF800000> : vector<16xf32>
    %46 = vector.multi_reduction <maximumf>, %45, %cst_32 [1] : vector<16x16xf32> to vector<16xf32>
    %47 = vector.shape_cast %46 : vector<16xf32> to vector<16x1xf32>
    %48 = vector.broadcast %47 : vector<16x1xf32> to vector<16x16xf32>
    %49 = arith.subf %45, %48 : vector<16x16xf32>
    %50 = math.exp %49 : vector<16x16xf32>
    %cst_33 = arith.constant dense<0.000000e+00> : vector<16xf32>
    %51 = vector.multi_reduction <add>, %50, %cst_33 [1] : vector<16x16xf32> to vector<16xf32>
    %52 = vector.shape_cast %51 : vector<16xf32> to vector<16x1xf32>
    %53 = tpu.reciprocal %52 {approx = true} : vector<16x1xf32> -> vector<16x1xf32>
    %cst_34 = arith.constant dense<0.000000e+00> : vector<16x32xf32>
    %54 = tpu.matmul %50, %43, %cst_34 {dimension_numbers = #tpu.dot_dimension_numbers<[1], [0], [0], [1], [0, 0, 1, 1], [], []>} : vector<16x16xf32>, vector<16x32xf32>, vector<16x32xf32> -> vector<16x32xf32>
    %55 = vector.broadcast %53 : vector<16x1xf32> to vector<16x32xf32>
    %56 = arith.mulf %54, %55 : vector<16x32xf32>
    %57 = vector.extract_strided_slice %12 {offsets = [0, 64], sizes = [16, 32], strides = [1, 1]} : vector<16x128xf32> to vector<16x32xf32>
    %58 = vector.extract_strided_slice %17 {offsets = [0, 64], sizes = [16, 32], strides = [1, 1]} : vector<16x128xf32> to vector<16x32xf32>
    %59 = vector.extract_strided_slice %22 {offsets = [0, 64], sizes = [16, 32], strides = [1, 1]} : vector<16x128xf32> to vector<16x32xf32>
    %cst_35 = arith.constant dense<0.000000e+00> : vector<16x16xf32>
    %60 = tpu.matmul %57, %58, %cst_35 {dimension_numbers = #tpu.dot_dimension_numbers<[1], [1], [0], [0], [0, 0, 1, 0], [], []>} : vector<16x32xf32>, vector<16x32xf32>, vector<16x16xf32> -> vector<16x16xf32>
    %61 = arith.addf %60, %24 : vector<16x16xf32>
    %cst_36 = arith.constant dense<0xFF800000> : vector<16xf32>
    %62 = vector.multi_reduction <maximumf>, %61, %cst_36 [1] : vector<16x16xf32> to vector<16xf32>
    %63 = vector.shape_cast %62 : vector<16xf32> to vector<16x1xf32>
    %64 = vector.broadcast %63 : vector<16x1xf32> to vector<16x16xf32>
    %65 = arith.subf %61, %64 : vector<16x16xf32>
    %66 = math.exp %65 : vector<16x16xf32>
    %cst_37 = arith.constant dense<0.000000e+00> : vector<16xf32>
    %67 = vector.multi_reduction <add>, %66, %cst_37 [1] : vector<16x16xf32> to vector<16xf32>
    %68 = vector.shape_cast %67 : vector<16xf32> to vector<16x1xf32>
    %69 = tpu.reciprocal %68 {approx = true} : vector<16x1xf32> -> vector<16x1xf32>
    %cst_38 = arith.constant dense<0.000000e+00> : vector<16x32xf32>
    %70 = tpu.matmul %66, %59, %cst_38 {dimension_numbers = #tpu.dot_dimension_numbers<[1], [0], [0], [1], [0, 0, 1, 1], [], []>} : vector<16x16xf32>, vector<16x32xf32>, vector<16x32xf32> -> vector<16x32xf32>
    %71 = vector.broadcast %69 : vector<16x1xf32> to vector<16x32xf32>
    %72 = arith.mulf %70, %71 : vector<16x32xf32>
    %73 = vector.extract_strided_slice %12 {offsets = [0, 96], sizes = [16, 32], strides = [1, 1]} : vector<16x128xf32> to vector<16x32xf32>
    %74 = vector.extract_strided_slice %17 {offsets = [0, 96], sizes = [16, 32], strides = [1, 1]} : vector<16x128xf32> to vector<16x32xf32>
    %75 = vector.extract_strided_slice %22 {offsets = [0, 96], sizes = [16, 32], strides = [1, 1]} : vector<16x128xf32> to vector<16x32xf32>
    %cst_39 = arith.constant dense<0.000000e+00> : vector<16x16xf32>
    %76 = tpu.matmul %73, %74, %cst_39 {dimension_numbers = #tpu.dot_dimension_numbers<[1], [1], [0], [0], [0, 0, 1, 0], [], []>} : vector<16x32xf32>, vector<16x32xf32>, vector<16x16xf32> -> vector<16x16xf32>
    %77 = arith.addf %76, %24 : vector<16x16xf32>
    %cst_40 = arith.constant dense<0xFF800000> : vector<16xf32>
    %78 = vector.multi_reduction <maximumf>, %77, %cst_40 [1] : vector<16x16xf32> to vector<16xf32>
    %79 = vector.shape_cast %78 : vector<16xf32> to vector<16x1xf32>
    %80 = vector.broadcast %79 : vector<16x1xf32> to vector<16x16xf32>
    %81 = arith.subf %77, %80 : vector<16x16xf32>
    %82 = math.exp %81 : vector<16x16xf32>
    %cst_41 = arith.constant dense<0.000000e+00> : vector<16xf32>
    %83 = vector.multi_reduction <add>, %82, %cst_41 [1] : vector<16x16xf32> to vector<16xf32>
    %84 = vector.shape_cast %83 : vector<16xf32> to vector<16x1xf32>
    %85 = tpu.reciprocal %84 {approx = true} : vector<16x1xf32> -> vector<16x1xf32>
    %cst_42 = arith.constant dense<0.000000e+00> : vector<16x32xf32>
    %86 = tpu.matmul %82, %75, %cst_42 {dimension_numbers = #tpu.dot_dimension_numbers<[1], [0], [0], [1], [0, 0, 1, 1], [], []>} : vector<16x16xf32>, vector<16x32xf32>, vector<16x32xf32> -> vector<16x32xf32>
    %87 = vector.broadcast %85 : vector<16x1xf32> to vector<16x32xf32>
    %88 = arith.mulf %86, %87 : vector<16x32xf32>
    %89 = tpu.concatenate %40, %56, %72, %88 in 1 : vector<16x32xf32>, vector<16x32xf32>, vector<16x32xf32>, vector<16x32xf32> -> vector<16x128xf32>
    %c0_43 = arith.constant 0 : index
    %c0_44 = arith.constant 0 : index
    %c0_45 = arith.constant 0 : index
    %90 = vector.load %arg11[%c0_43, %c0_44, %c0_45] : memref<1x16x128xf32, #tpu.memory_space<vmem>>, vector<1x16x128xf32>
    %91 = vector.shape_cast %90 : vector<1x16x128xf32> to vector<16x128xf32>
    %92 = vector.shape_cast %89 : vector<16x128xf32> to vector<1x16x128xf32>
    tpu.vector_store %arg11[%c0_43, %c0_44, %c0_45], %92 {strides = array<i32>} : memref<1x16x128xf32, #tpu.memory_space<vmem>>, vector<1x16x128xf32>,
    return
  }
  func.func @transform_0(%arg0: i32) -> (i32, i32, i32) {
    %c0_i32 = arith.constant 0 : i32
    %c0_i32_0 = arith.constant 0 : i32
    %c0_i32_1 = arith.constant 0 : i32
    return %arg0, %c0_i32, %c0_i32_0 : i32, i32, i32
  }
  func.func @transform_1(%arg0: i32) -> (i32, i32, i32) {
    %c0_i32 = arith.constant 0 : i32
    %c0_i32_0 = arith.constant 0 : i32
    %c0_i32_1 = arith.constant 0 : i32
    return %arg0, %c0_i32, %c0_i32_0 : i32, i32, i32
  }
  func.func @transform_2(%arg0: i32) -> (i32, i32, i32) {
    %c0_i32 = arith.constant 0 : i32
    %c0_i32_0 = arith.constant 0 : i32
    %c0_i32_1 = arith.constant 0 : i32
    return %arg0, %c0_i32, %c0_i32_0 : i32, i32, i32
  }
  func.func @transform_3(%arg0: i32) -> (i32, i32) {
    %c0_i32 = arith.constant 0 : i32
    %c0_i32_0 = arith.constant 0 : i32
    %c0_i32_1 = arith.constant 0 : i32
    return %c0_i32, %c0_i32_0 : i32, i32
  }
  func.func @transform_4(%arg0: i32) -> (i32, i32) {
    %c0_i32 = arith.constant 0 : i32
    %c0_i32_0 = arith.constant 0 : i32
    %c0_i32_1 = arith.constant 0 : i32
    return %c0_i32, %c0_i32_0 : i32, i32
  }
  func.func @transform_5(%arg0: i32) -> (i32, i32) {
    %c0_i32 = arith.constant 0 : i32
    %c0_i32_0 = arith.constant 0 : i32
    %c0_i32_1 = arith.constant 0 : i32
    return %c0_i32, %c0_i32_0 : i32, i32
  }
  func.func @transform_6(%arg0: i32) -> (i32, i32) {
    %c0_i32 = arith.constant 0 : i32
    %c0_i32_0 = arith.constant 0 : i32
    %c0_i32_1 = arith.constant 0 : i32
    return %c0_i32, %c0_i32_0 : i32, i32
  }
  func.func @transform_7(%arg0: i32) -> (i32, i32) {
    %c0_i32 = arith.constant 0 : i32
    %c0_i32_0 = arith.constant 0 : i32
    %c0_i32_1 = arith.constant 0 : i32
    return %c0_i32, %c0_i32_0 : i32, i32
  }
  func.func @transform_8(%arg0: i32) -> (i32, i32) {
    %c0_i32 = arith.constant 0 : i32
    %c0_i32_0 = arith.constant 0 : i32
    %c0_i32_1 = arith.constant 0 : i32
    return %c0_i32, %c0_i32_0 : i32, i32
  }
  func.func @transform_9(%arg0: i32) -> (i32, i32, i32, i32) {
    %c0_i32 = arith.constant 0 : i32
    %c0_i32_0 = arith.constant 0 : i32
    %c0_i32_1 = arith.constant 0 : i32
    %c0_i32_2 = arith.constant 0 : i32
    return %arg0, %c0_i32, %c0_i32_0, %c0_i32_1 : i32, i32, i32, i32
  }
  func.func @transform_10(%arg0: i32) -> (i32, i32, i32) {
    %c0_i32 = arith.constant 0 : i32
    %c0_i32_0 = arith.constant 0 : i32
    %c0_i32_1 = arith.constant 0 : i32
    return %arg0, %c0_i32, %c0_i32_0 : i32, i32, i32
  }
}

</mosaic_0001>

<llo_original>
// kernel: tpu_custom_call.1
$region0: #{tpu_custom_call.1}
  #allocation0 [shape = 'u32[]', space=smem, size = 0x4, offset = 0x4, fixed_abs, tag = 'smem constant byte address 0x4 - core index']
  #allocation1 [shape = 'u32[144,128]{1,0:T(1,128)}', space=vmem, size = 0x12000, scoped, tag = 'internal scratch']
  %s0 = inlined_call_operand.hbm [shape: f32[2,16,64], index: 0, kind: input, shape index: {}]
  %s1 = inlined_call_operand.hbm [shape: f32[2,16,64], index: 1, kind: input, shape index: {}]
  %s2 = inlined_call_operand.hbm [shape: f32[2,16,64], index: 2, kind: input, shape index: {}]
  %s3 = inlined_call_operand.hbm [shape: f32[64,128], index: 3, kind: input, shape index: {}]
  %s4 = inlined_call_operand.hbm [shape: f32[64,128], index: 4, kind: input, shape index: {}]
  %s5 = inlined_call_operand.hbm [shape: f32[64,128], index: 5, kind: input, shape index: {}]
  %s6 = inlined_call_operand.vmem [shape: f32[1,128], index: 6, kind: input, shape index: {}]
  %s7 = inlined_call_operand.vmem [shape: f32[1,128], index: 7, kind: input, shape index: {}]
  %s8 = inlined_call_operand.hbm [shape: f32[1,128], index: 8, kind: input, shape index: {}]
  %s9 = inlined_call_operand.vmem [shape: f32[2,1,16,16], index: 9, kind: input, shape index: {}]
  %s10 = inlined_call_operand.hbm [shape: f32[2,16,128], index: 10, kind: output, shape index: {}]
  %s11 = sld [smem:[#allocation0]]
  $region101: #{tpu_custom_call.1} parent=0
    _
  %s13 = ssub.s32 1, %s11
  %s14 = scalar_select 0, %s13, %s11
  $region1: #{tpu_custom_call.1} parent=0
    #allocation2 [shape = 'u8[16384]{0}', space=vmem, size = 0x4000, scoped, tag = 'input window, operand 0']
    #allocation3 [shape = 's32[2]{0}', space=sflag, size = 0x8, scoped, tag = 'scoped memory for tpu_custom_call.1']
    #allocation4 [shape = 's32[2]{0}', space=sflag, size = 0x8, scoped, tag = 'scoped memory for tpu_custom_call.1']
    #allocation5 [shape = 'u8[16384]{0}', space=vmem, size = 0x4000, scoped, tag = 'input window, operand 1']
    #allocation6 [shape = 's32[2]{0}', space=sflag, size = 0x8, scoped, tag = 'scoped memory for tpu_custom_call.1']
    #allocation7 [shape = 'u8[16384]{0}', space=vmem, size = 0x4000, scoped, tag = 'input window, operand 2']
    #allocation8 [shape = 'u8[32768]{0}', space=vmem, size = 0x8000, scoped, tag = 'input window, operand 3, single buffered']
    #allocation9 [shape = 's32[1]{0}', space=sflag, size = 0x4, scoped, tag = 'scoped memory for tpu_custom_call.1']
    #allocation10 [shape = 'u8[32768]{0}', space=vmem, size = 0x8000, scoped, tag = 'input window, operand 4, single buffered']
    #allocation11 [shape = 'u8[32768]{0}', space=vmem, size = 0x8000, scoped, tag = 'input window, operand 5, single buffered']
    #allocation12 [shape = 's32[1]{0}', space=sflag, size = 0x4, scoped, tag = 'scoped memory for tpu_custom_call.1']
    #allocation13 [shape = 'u8[512]{0}', space=vmem, size = 0x400, scoped, tag = 'input window, operand 8, single buffered']
    #allocation14 [shape = 'u8[16384]{0}', space=vmem, size = 0x4000, scoped, tag = 'output window, operand 0']
    %15 = vsyncpa [#allocation3], 0
    %s16 = scalar_lea.sflag [#allocation3], 1
    %17 = vsyncpa %s16, 0
    %18 = vsyncpa [#allocation6], 0
    %s19 = scalar_lea.sflag [#allocation6], 1
    %20 = vsyncpa %s19, 0
    %21 = vsyncpa [#allocation9], 0
    %22 = vsyncpa [#allocation12], 0
    %23 = vsyncpa [#allocation4], 0
    %s24 = scalar_lea.sflag [#allocation4], 1
    %25 = vsyncpa %s24, 0
    loop: start=0, step=1, limit=4
    $region2: #{tpu_custom_call.1} parent=1 // loop_pre_header
      _
    $region3: #{tpu_custom_call.1} parent=1 // loop_header
      %s27 = sphi 0, %s31
      %p28 = scmp.ge.s32.totalorder %s27, 4
      %s37 = sphi 0, %s39
      %s40 = sphi 0, %s37
      %s41 = sphi 0, %s40
      %s57 = sphi 0, %s41
      %s63 = sphi 0, %s65
      %s66 = sphi 0, %s63
      %s67 = sphi 0, %s66
      %s83 = sphi 0, %s67
      %s89 = sphi 0, %s91
      %s92 = sphi 0, %s89
      %s93 = sphi 0, %s92
      %s109 = sphi 0, %s93
      %s113 = sphi 0, %s113
      %s115 = sphi 0, %s113
      %s116 = sphi 0, %s115
      %s130 = sphi 0, %s116
      %s134 = sphi 0, %s134
      %s136 = sphi 0, %s134
      %s137 = sphi 0, %s136
      %s151 = sphi 0, %s137
      %s155 = sphi 0, %s155
      %s157 = sphi 0, %s155
      %s158 = sphi 0, %s157
      %s172 = sphi 0, %s158
      %s176 = sphi 0, %s176
      %s178 = sphi 0, %s176
      %s179 = sphi 0, %s178
      %s193 = sphi 0, %s179
      %s197 = sphi 0, %s197
      %s199 = sphi 0, %s197
      %s200 = sphi 0, %s199
      %s214 = sphi 0, %s200
      %s218 = sphi 0, %s218
      %s220 = sphi 0, %s218
      %s221 = sphi 0, %s220
      %s235 = sphi 0, %s221
      %s241 = sphi 0, %s243
      %s244 = sphi 0, %s241
      %s245 = sphi 0, %s244
      %s261 = sphi 0, %s245
      %s267 = sphi 0, %s269
      %s270 = sphi 0, %s267
      %s271 = sphi 0, %s270
      %s287 = sphi 0, %s271
    $region4: #{tpu_custom_call.1} parent=1 // loop_header_branch
      %30 = sbr.rel (%p28) target = $region8
    $region5: #{tpu_custom_call.1} parent=1 // loop_body
      %s32 = ssub.s32 %s27, 1
      %s33 = ssub.s32 %s27, 2
      %s34 = sadd.s32 %s27, 1
      %s35 = ssub.s32 %s27, %s34
      %p36 = scmp.eq.s32.totalorder %s35, 0
      %s38 = sadd.s32 %s37, 1
      %s39 = scalar_select %p36, %s37, %s38
      %p42 = pneg %p36
      %p43 = scmp.eq.s32.totalorder %s27, 1
      %p44 = por %p42, %p43
      %p45 = scmp.ne.s32.totalorder %s37, %s40
      %p46 = scmp.eq.s32.totalorder %s27, 0
      %p47 = por %p45, %p46
      %p48 = scmp.ne.s32.totalorder %s37, %s40
      %p49 = scmp.eq.s32.totalorder %s32, 1
      %p50 = por %p48, %p49
      %p51 = scmp.ne.s32.totalorder %s40, %s41
      %p52 = scmp.eq.s32.totalorder %s32, 0
      %p53 = por %p51, %p52
      %p54 = scmp.ne.s32.totalorder %s40, %s41
      %p55 = scmp.eq.s32.totalorder %s33, 1
      %p56 = por %p54, %p55
      %p58 = scmp.ne.s32.totalorder %s41, %s57
      %p59 = scmp.eq.s32.totalorder %s33, 0
      %p60 = por %p58, %p59
      %s61 = ssub.s32 %s27, %s34
      %p62 = scmp.eq.s32.totalorder %s61, 0
      %s64 = sadd.s32 %s63, 1
      %s65 = scalar_select %p62, %s63, %s64
      %p68 = pneg %p62
      %p69 = scmp.eq.s32.totalorder %s27, 1
      %p70 = por %p68, %p69
      %p71 = scmp.ne.s32.totalorder %s63, %s66
      %p72 = scmp.eq.s32.totalorder %s27, 0
      %p73 = por %p71, %p72
      %p74 = scmp.ne.s32.totalorder %s63, %s66
      %p75 = scmp.eq.s32.totalorder %s32, 1
      %p76 = por %p74, %p75
      %p77 = scmp.ne.s32.totalorder %s66, %s67
      %p78 = scmp.eq.s32.totalorder %s32, 0
      %p79 = por %p77, %p78
      %p80 = scmp.ne.s32.totalorder %s66, %s67
      %p81 = scmp.eq.s32.totalorder %s33, 1
      %p82 = por %p80, %p81
      %p84 = scmp.ne.s32.totalorder %s67, %s83
      %p85 = scmp.eq.s32.totalorder %s33, 0
      %p86 = por %p84, %p85
      %s87 = ssub.s32 %s27, %s34
      %p88 = scmp.eq.s32.totalorder %s87, 0
      %s90 = sadd.s32 %s89, 1
      %s91 = scalar_select %p88, %s89, %s90
      %p94 = pneg %p88
      %p95 = scmp.eq.s32.totalorder %s27, 1
      %p96 = por %p94, %p95
      %p97 = scmp.ne.s32.totalorder %s89, %s92
      %p98 = scmp.eq.s32.totalorder %s27, 0
      %p99 = por %p97, %p98
      %p100 = scmp.ne.s32.totalorder %s89, %s92
      %p101 = scmp.eq.s32.totalorder %s32, 1
      %p102 = por %p100, %p101
      %p103 = scmp.ne.s32.totalorder %s92, %s93
      %p104 = scmp.eq.s32.totalorder %s32, 0
      %p105 = por %p103, %p104
      %p106 = scmp.ne.s32.totalorder %s92, %s93
      %p107 = scmp.eq.s32.totalorder %s33, 1
      %p108 = por %p106, %p107
      %p110 = scmp.ne.s32.totalorder %s93, %s109
      %p111 = scmp.eq.s32.totalorder %s33, 0
      %p112 = por %p110, %p111
      %s114 = sadd.s32 %s113, 1
      %p117 = scmp.eq.s32.totalorder %s27, 1
      %p118 = scmp.ne.s32.totalorder %s113, %s115
      %p119 = scmp.eq.s32.totalorder %s27, 0
      %p120 = por %p118, %p119
      %p121 = scmp.ne.s32.totalorder %s113, %s115
      %p122 = scmp.eq.s32.totalorder %s32, 1
      %p123 = por %p121, %p122
      %p124 = scmp.ne.s32.totalorder %s115, %s116
      %p125 = scmp.eq.s32.totalorder %s32, 0
      %p126 = por %p124, %p125
      %p127 = scmp.ne.s32.totalorder %s115, %s116
      %p128 = scmp.eq.s32.totalorder %s33, 1
      %p129 = por %p127, %p128
      %p131 = scmp.ne.s32.totalorder %s116, %s130
      %p132 = scmp.eq.s32.totalorder %s33, 0
      %p133 = por %p131, %p132
      %s135 = sadd.s32 %s134, 1
      %p138 = scmp.eq.s32.totalorder %s27, 1
      %p139 = scmp.ne.s32.totalorder %s134, %s136
      %p140 = scmp.eq.s32.totalorder %s27, 0
      %p141 = por %p139, %p140
      %p142 = scmp.ne.s32.totalorder %s134, %s136
      %p143 = scmp.eq.s32.totalorder %s32, 1
      %p144 = por %p142, %p143
      %p145 = scmp.ne.s32.totalorder %s136, %s137
      %p146 = scmp.eq.s32.totalorder %s32, 0
      %p147 = por %p145, %p146
      %p148 = scmp.ne.s32.totalorder %s136, %s137
      %p149 = scmp.eq.s32.totalorder %s33, 1
      %p150 = por %p148, %p149
      %p152 = scmp.ne.s32.totalorder %s137, %s151
      %p153 = scmp.eq.s32.totalorder %s33, 0
      %p154 = por %p152, %p153
      %s156 = sadd.s32 %s155, 1
      %p159 = scmp.eq.s32.totalorder %s27, 1
      %p160 = scmp.ne.s32.totalorder %s155, %s157
      %p161 = scmp.eq.s32.totalorder %s27, 0
      %p162 = por %p160, %p161
      %p163 = scmp.ne.s32.totalorder %s155, %s157
      %p164 = scmp.eq.s32.totalorder %s32, 1
      %p165 = por %p163, %p164
      %p166 = scmp.ne.s32.totalorder %s157, %s158
      %p167 = scmp.eq.s32.totalorder %s32, 0
      %p168 = por %p166, %p167
      %p169 = scmp.ne.s32.totalorder %s157, %s158
      %p170 = scmp.eq.s32.totalorder %s33, 1
      %p171 = por %p169, %p170
      %p173 = scmp.ne.s32.totalorder %s158, %s172
      %p174 = scmp.eq.s32.totalorder %s33, 0
      %p175 = por %p173, %p174
      %s177 = sadd.s32 %s176, 1
      %p180 = scmp.eq.s32.totalorder %s27, 1
      %p181 = scmp.ne.s32.totalorder %s176, %s178
      %p182 = scmp.eq.s32.totalorder %s27, 0
      %p183 = por %p181, %p182
      %p184 = scmp.ne.s32.totalorder %s176, %s178
      %p185 = scmp.eq.s32.totalorder %s32, 1
      %p186 = por %p184, %p185
      %p187 = scmp.ne.s32.totalorder %s178, %s179
      %p188 = scmp.eq.s32.totalorder %s32, 0
      %p189 = por %p187, %p188
      %p190 = scmp.ne.s32.totalorder %s178, %s179
      %p191 = scmp.eq.s32.totalorder %s33, 1
      %p192 = por %p190, %p191
      %p194 = scmp.ne.s32.totalorder %s179, %s193
      %p195 = scmp.eq.s32.totalorder %s33, 0
      %p196 = por %p194, %p195
      %s198 = sadd.s32 %s197, 1
      %p201 = scmp.eq.s32.totalorder %s27, 1
      %p202 = scmp.ne.s32.totalorder %s197, %s199
      %p203 = scmp.eq.s32.totalorder %s27, 0
      %p204 = por %p202, %p203
      %p205 = scmp.ne.s32.totalorder %s197, %s199
      %p206 = scmp.eq.s32.totalorder %s32, 1
      %p207 = por %p205, %p206
      %p208 = scmp.ne.s32.totalorder %s199, %s200
      %p209 = scmp.eq.s32.totalorder %s32, 0
      %p210 = por %p208, %p209
      %p211 = scmp.ne.s32.totalorder %s199, %s200
      %p212 = scmp.eq.s32.totalorder %s33, 1
      %p213 = por %p211, %p212
      %p215 = scmp.ne.s32.totalorder %s200, %s214
      %p216 = scmp.eq.s32.totalorder %s33, 0
      %p217 = por %p215, %p216
      %s219 = sadd.s32 %s218, 1
      %p222 = scmp.eq.s32.totalorder %s27, 1
      %p223 = scmp.ne.s32.totalorder %s218, %s220
      %p224 = scmp.eq.s32.totalorder %s27, 0
      %p225 = por %p223, %p224
      %p226 = scmp.ne.s32.totalorder %s218, %s220
      %p227 = scmp.eq.s32.totalorder %s32, 1
      %p228 = por %p226, %p227
      %p229 = scmp.ne.s32.totalorder %s220, %s221
      %p230 = scmp.eq.s32.totalorder %s32, 0
      %p231 = por %p229, %p230
      %p232 = scmp.ne.s32.totalorder %s220, %s221
      %p233 = scmp.eq.s32.totalorder %s33, 1
      %p234 = por %p232, %p233
      %p236 = scmp.ne.s32.totalorder %s221, %s235
      %p237 = scmp.eq.s32.totalorder %s33, 0
      %p238 = por %p236, %p237
      %s239 = ssub.s32 %s27, %s34
      %p240 = scmp.eq.s32.totalorder %s239, 0
      %s242 = sadd.s32 %s241, 1
      %s243 = scalar_select %p240, %s241, %s242
      %p246 = pneg %p240
      %p247 = scmp.eq.s32.totalorder %s27, 1
      %p248 = por %p246, %p247
      %p249 = scmp.ne.s32.totalorder %s241, %s244
      %p250 = scmp.eq.s32.totalorder %s27, 0
      %p251 = por %p249, %p250
      %p252 = scmp.ne.s32.totalorder %s241, %s244
      %p253 = scmp.eq.s32.totalorder %s32, 1
      %p254 = por %p252, %p253
      %p255 = scmp.ne.s32.totalorder %s244, %s245
      %p256 = scmp.eq.s32.totalorder %s32, 0
      %p257 = por %p255, %p256
      %p258 = scmp.ne.s32.totalorder %s244, %s245
      %p259 = scmp.eq.s32.totalorder %s33, 1
      %p260 = por %p258, %p259
      %p262 = scmp.ne.s32.totalorder %s245, %s261
      %p263 = scmp.eq.s32.totalorder %s33, 0
      %p264 = por %p262, %p263
      %s265 = ssub.s32 %s27, %s34
      %p266 = scmp.eq.s32.totalorder %s265, 0
      %s268 = sadd.s32 %s267, 1
      %s269 = scalar_select %p266, %s267, %s268
      %p272 = pneg %p266
      %p273 = scmp.eq.s32.totalorder %s27, 1
      %p274 = por %p272, %p273
      %p275 = scmp.ne.s32.totalorder %s267, %s270
      %p276 = scmp.eq.s32.totalorder %s27, 0
      %p277 = por %p275, %p276
      %p278 = scmp.ne.s32.totalorder %s267, %s270
      %p279 = scmp.eq.s32.totalorder %s32, 1
      %p280 = por %p278, %p279
      %p281 = scmp.ne.s32.totalorder %s270, %s271
      %p282 = scmp.eq.s32.totalorder %s32, 0
      %p283 = por %p281, %p282
      %p284 = scmp.ne.s32.totalorder %s270, %s271
      %p285 = scmp.eq.s32.totalorder %s33, 1
      %p286 = por %p284, %p285
      %p288 = scmp.ne.s32.totalorder %s271, %s287
      %p289 = scmp.eq.s32.totalorder %s33, 0
      %p290 = por %p288, %p289
      %p291 = scmp.le.s32.totalorder 1, %s27
      %p292 = scmp.lt.s32.totalorder %s27, 3
      %p293 = pnand %p291, %p292
      %p294 = pneg %p293
      // Predicated region
      $region9: #{tpu_custom_call.1} parent=5 // pred_check
        _
      $region10: #{tpu_custom_call.1} parent=5 // pred_check_branch
        %296 = sbr.rel (%p293) target = $region12
      $region11: #{tpu_custom_call.1} parent=5 // pred_region
        %s297 = ssub.s32 %s27, 1
        // Predicated region
        $region13: #{tpu_custom_call.1} parent=11 // pred_check
          %p298 = pneg %p126
        $region14: #{tpu_custom_call.1} parent=11 // pred_check_branch
          %300 = sbr.rel (%p298) target = $region16
        $region15: #{tpu_custom_call.1} parent=11 // pred_region
          %s302 = ssub.s32 1024, 1024
          %303 = vsyncadd [#allocation9], %s302
          %s304 = sshll.u32 [#allocation8], 4
          %s305 = int_to_ptr.vmem [resolvable:$true] %s304
          %310 = dma.hbm_to_vmem [thread:$0]  %s3, 1024, %s305, [#allocation9], 128, 128, 8
        $region16: #{tpu_custom_call.1} parent=11 // pred_fallthru
          _
        // Predicated region
        $region17: #{tpu_custom_call.1} parent=11 // pred_check
          %p311 = pneg %p147
        $region18: #{tpu_custom_call.1} parent=11 // pred_check_branch
          %313 = sbr.rel (%p311) target = $region20
        $region19: #{tpu_custom_call.1} parent=11 // pred_region
          %s315 = ssub.s32 1024, 1024
          %316 = vsyncadd [#allocation9], %s315
          %s317 = sshll.u32 [#allocation10], 4
          %s318 = int_to_ptr.vmem [resolvable:$true] %s317
          %323 = dma.hbm_to_vmem [thread:$0]  %s4, 1024, %s318, [#allocation9], 128, 128, 8
        $region20: #{tpu_custom_call.1} parent=11 // pred_fallthru
          _
        // Predicated region
        $region21: #{tpu_custom_call.1} parent=11 // pred_check
          %p324 = pneg %p168
        $region22: #{tpu_custom_call.1} parent=11 // pred_check_branch
          %326 = sbr.rel (%p324) target = $region24
        $region23: #{tpu_custom_call.1} parent=11 // pred_region
          %s328 = ssub.s32 1024, 1024
          %329 = vsyncadd [#allocation12], %s328
          %s330 = sshll.u32 [#allocation11], 4
          %s331 = int_to_ptr.vmem [resolvable:$true] %s330
          %336 = dma.hbm_to_vmem [thread:$0]  %s5, 1024, %s331, [#allocation12], 128, 128, 8
        $region24: #{tpu_custom_call.1} parent=11 // pred_fallthru
          _
        // Predicated region
        $region25: #{tpu_custom_call.1} parent=11 // pred_check
          %p337 = pneg %p189
        $region26: #{tpu_custom_call.1} parent=11 // pred_check_branch
          %339 = sbr.rel (%p337) target = $region28
        $region27: #{tpu_custom_call.1} parent=11 // pred_region
          _
        $region28: #{tpu_custom_call.1} parent=11 // pred_fallthru
          _
        // Predicated region
        $region29: #{tpu_custom_call.1} parent=11 // pred_check
          %p340 = pneg %p210
        $region30: #{tpu_custom_call.1} parent=11 // pred_check_branch
          %342 = sbr.rel (%p340) target = $region32
        $region31: #{tpu_custom_call.1} parent=11 // pred_region
          _
        $region32: #{tpu_custom_call.1} parent=11 // pred_fallthru
          _
        // Predicated region
        $region33: #{tpu_custom_call.1} parent=11 // pred_check
          %p343 = pneg %p231
        $region34: #{tpu_custom_call.1} parent=11 // pred_check_branch
          %345 = sbr.rel (%p343) target = $region36
        $region35: #{tpu_custom_call.1} parent=11 // pred_region
          %s347 = ssub.s32 16, 16
          %348 = vsyncadd [#allocation12], %s347
          %s350 = sshll.u32 [#allocation13], 4
          %s351 = int_to_ptr.vmem [resolvable:$true] %s350
          %353 = dma.hbm_to_vmem [thread:$0]  %s8, 16, %s351, [#allocation12]
        $region36: #{tpu_custom_call.1} parent=11 // pred_fallthru
          _
      $region12: #{tpu_custom_call.1} parent=5 // pred_fallthru
        _
      %p354 = scmp.lt.s32.totalorder %s27, 2
      // Predicated region
      $region37: #{tpu_custom_call.1} parent=5 // pred_check
        %p355 = pneg %p354
      $region38: #{tpu_custom_call.1} parent=5 // pred_check_branch
        %357 = sbr.rel (%p355) target = $region40
      $region39: #{tpu_custom_call.1} parent=5 // pred_region
        // Predicated region
        $region41: #{tpu_custom_call.1} parent=39 // pred_check
          %p358 = pneg %p47
        $region42: #{tpu_custom_call.1} parent=39 // pred_check_branch
          %360 = sbr.rel (%p358) target = $region44
        $region43: #{tpu_custom_call.1} parent=39 // pred_region
          %s361 = sand.u32 %s37, 1
          %s362 = scalar_lea.sflag [#allocation3], %s361
          %s363 = sand.u32 %s37, 1
          %s364 = smul.addr %s363, 16
          %s365 = scalar_lea.vmem [#allocation2], %s364
          %s367 = ssub.s32 256, 256
          %368 = vsyncadd %s362, %s367
          %s369 = smul.addr %s27, 2
          %s370 = smul.addr %s369, 128
          %s371 = scalar_lea.hbm %s0, %s370
          %s372 = sshll.u32 %s365, 4
          %s373 = int_to_ptr.vmem [resolvable:$true] %s372
          %378 = dma.hbm_to_vmem [thread:$0]  %s371, 256, %s373, %s362, 128, 128, 8
        $region44: #{tpu_custom_call.1} parent=39 // pred_fallthru
          _
        // Predicated region
        $region45: #{tpu_custom_call.1} parent=39 // pred_check
          %p379 = pneg %p73
        $region46: #{tpu_custom_call.1} parent=39 // pred_check_branch
          %381 = sbr.rel (%p379) target = $region48
        $region47: #{tpu_custom_call.1} parent=39 // pred_region
          %s382 = sand.u32 %s27, 1
          %s383 = scalar_lea.sflag [#allocation6], %s382
          %s384 = sand.u32 %s63, 1
          %s385 = smul.addr %s384, 16
          %s386 = scalar_lea.vmem [#allocation5], %s385
          %s388 = ssub.s32 256, 256
          %389 = vsyncadd %s383, %s388
          %s390 = smul.addr %s27, 2
          %s391 = smul.addr %s390, 128
          %s392 = scalar_lea.hbm %s1, %s391
          %s393 = sshll.u32 %s386, 4
          %s394 = int_to_ptr.vmem [resolvable:$true] %s393
          %399 = dma.hbm_to_vmem [thread:$0]  %s392, 256, %s394, %s383, 128, 128, 8
        $region48: #{tpu_custom_call.1} parent=39 // pred_fallthru
          _
        // Predicated region
        $region49: #{tpu_custom_call.1} parent=39 // pred_check
          %p400 = pneg %p99
        $region50: #{tpu_custom_call.1} parent=39 // pred_check_branch
          %402 = sbr.rel (%p400) target = $region52
        $region51: #{tpu_custom_call.1} parent=39 // pred_region
          %s403 = sand.u32 %s27, 1
          %s404 = scalar_lea.sflag [#allocation6], %s403
          %s405 = sand.u32 %s89, 1
          %s406 = smul.addr %s405, 16
          %s407 = scalar_lea.vmem [#allocation7], %s406
          %s409 = ssub.s32 256, 256
          %410 = vsyncadd %s404, %s409
          %s411 = smul.addr %s27, 2
          %s412 = smul.addr %s411, 128
          %s413 = scalar_lea.hbm %s2, %s412
          %s414 = sshll.u32 %s407, 4
          %s415 = int_to_ptr.vmem [resolvable:$true] %s414
          %420 = dma.hbm_to_vmem [thread:$0]  %s413, 256, %s415, %s404, 128, 128, 8
        $region52: #{tpu_custom_call.1} parent=39 // pred_fallthru
          _
        // Predicated region
        $region53: #{tpu_custom_call.1} parent=39 // pred_check
          %p421 = pneg %p251
        $region54: #{tpu_custom_call.1} parent=39 // pred_check_branch
          %423 = sbr.rel (%p421) target = $region56
        $region55: #{tpu_custom_call.1} parent=39 // pred_region
          %p424 = scmp.lt.s32.totalorder %s27, 1
          %s425 = scalar_select %p424, %s27, 1
          %s426 = smul.addr %s425, 2
          %s427 = smul.addr %s426, 8
          %s428 = scalar_lea.vmem %s9, %s427
        $region56: #{tpu_custom_call.1} parent=39 // pred_fallthru
          _
      $region40: #{tpu_custom_call.1} parent=5 // pred_fallthru
        _
      %p429 = scmp.le.s32.totalorder 1, %s27
      %p430 = scmp.lt.s32.totalorder %s27, 3
      %p431 = pnand %p429, %p430
      %p432 = pneg %p431
      // Predicated region
      $region57: #{tpu_custom_call.1} parent=5 // pred_check
        _
      $region58: #{tpu_custom_call.1} parent=5 // pred_check_branch
        %434 = sbr.rel (%p431) target = $region60
      $region59: #{tpu_custom_call.1} parent=5 // pred_region
        %s435 = ssub.s32 %s27, 1
        %s436 = sand.u32 %s40, 1
        %s437 = scalar_lea.sflag [#allocation3], %s436
        %s438 = sand.u32 %s40, 1
        %s439 = smul.addr %s438, 16
        %s440 = scalar_lea.vmem [#allocation2], %s439
        // Predicated region
        $region61: #{tpu_custom_call.1} parent=59 // pred_check
          %p441 = pneg %p53
        $region62: #{tpu_custom_call.1} parent=59 // pred_check_branch
          %443 = sbr.rel (%p441) target = $region64
        $region63: #{tpu_custom_call.1} parent=59 // pred_region
          %444 = dma.done %s437, 256
        $region64: #{tpu_custom_call.1} parent=59 // pred_fallthru
          _
        %s445 = sand.u32 %s32, 1
        %s446 = scalar_lea.sflag [#allocation6], %s445
        %s447 = sand.u32 %s66, 1
        %s448 = smul.addr %s447, 16
        %s449 = scalar_lea.vmem [#allocation5], %s448
        // Predicated region
        $region65: #{tpu_custom_call.1} parent=59 // pred_check
          %p450 = pneg %p79
        $region66: #{tpu_custom_call.1} parent=59 // pred_check_branch
          %452 = sbr.rel (%p450) target = $region68
        $region67: #{tpu_custom_call.1} parent=59 // pred_region
          %453 = dma.done %s446, 256
        $region68: #{tpu_custom_call.1} parent=59 // pred_fallthru
          _
        %s454 = sand.u32 %s32, 1
        %s455 = scalar_lea.sflag [#allocation6], %s454
        %s456 = sand.u32 %s92, 1
        %s457 = smul.addr %s456, 16
        %s458 = scalar_lea.vmem [#allocation7], %s457
        // Predicated region
        $region69: #{tpu_custom_call.1} parent=59 // pred_check
          %p459 = pneg %p105
        $region70: #{tpu_custom_call.1} parent=59 // pred_check_branch
          %461 = sbr.rel (%p459) target = $region72
        $region71: #{tpu_custom_call.1} parent=59 // pred_region
          %462 = dma.done %s455, 256
        $region72: #{tpu_custom_call.1} parent=59 // pred_fallthru
          _
        // Predicated region
        $region73: #{tpu_custom_call.1} parent=59 // pred_check
          %p463 = pneg %p126
        $region74: #{tpu_custom_call.1} parent=59 // pred_check_branch
          %465 = sbr.rel (%p463) target = $region76
        $region75: #{tpu_custom_call.1} parent=59 // pred_region
          %466 = dma.done [#allocation9], 1024
        $region76: #{tpu_custom_call.1} parent=59 // pred_fallthru
          _
        // Predicated region
        $region77: #{tpu_custom_call.1} parent=59 // pred_check
          %p467 = pneg %p147
        $region78: #{tpu_custom_call.1} parent=59 // pred_check_branch
          %469 = sbr.rel (%p467) target = $region80
        $region79: #{tpu_custom_call.1} parent=59 // pred_region
          %470 = dma.done [#allocation9], 1024
        $region80: #{tpu_custom_call.1} parent=59 // pred_fallthru
          _
        // Predicated region
        $region81: #{tpu_custom_call.1} parent=59 // pred_check
          %p471 = pneg %p168
        $region82: #{tpu_custom_call.1} parent=59 // pred_check_branch
          %473 = sbr.rel (%p471) target = $region84
        $region83: #{tpu_custom_call.1} parent=59 // pred_region
          %474 = dma.done [#allocation12], 1024
        $region84: #{tpu_custom_call.1} parent=59 // pred_fallthru
          _
        // Predicated region
        $region85: #{tpu_custom_call.1} parent=59 // pred_check
          %p475 = pneg %p231
        $region86: #{tpu_custom_call.1} parent=59 // pred_check_branch
          %477 = sbr.rel (%p475) target = $region88
        $region87: #{tpu_custom_call.1} parent=59 // pred_region
          %478 = dma.done [#allocation12], 16
        $region88: #{tpu_custom_call.1} parent=59 // pred_fallthru
          _
        %s479 = sand.u32 %s40, 1
        %s480 = scalar_lea.sflag [#allocation3], %s479
        %s481 = sand.u32 %s40, 1
        %s482 = smul.addr %s481, 16
        %s483 = scalar_lea.vmem [#allocation2], %s482
        %p484 = pneg %p53
        %p485 = pneg %p50
        %s486 = sand.u32 %s32, 1
        %s487 = scalar_lea.sflag [#allocation6], %s486
        %s488 = sand.u32 %s66, 1
        %s489 = smul.addr %s488, 16
        %s490 = scalar_lea.vmem [#allocation5], %s489
        %p491 = pneg %p79
        %p492 = pneg %p76
        %s493 = sand.u32 %s32, 1
        %s494 = scalar_lea.sflag [#allocation6], %s493
        %s495 = sand.u32 %s92, 1
        %s496 = smul.addr %s495, 16
        %s497 = scalar_lea.vmem [#allocation7], %s496
        %p498 = pneg %p105
        %p499 = pneg %p102
        %p500 = pneg %p126
        %p501 = pneg %p123
        %p502 = pneg %p147
        %p503 = pneg %p144
        %p504 = pneg %p168
        %p505 = pneg %p165
        %p506 = pneg %p189
        %p507 = pneg %p186
        %p508 = pneg %p210
        %p509 = pneg %p207
        %p510 = pneg %p231
        %p511 = pneg %p228
        %p512 = scmp.lt.s32.totalorder %s32, 1
        %s513 = scalar_select %p512, %s32, 1
        %s514 = smul.addr %s513, 2
        %s515 = smul.addr %s514, 8
        %s516 = scalar_lea.vmem %s9, %s515
        %p517 = pneg %p257
        %p518 = pneg %p254
        %p519 = pneg %p283
        %p520 = pneg %p280
        %s521 = sand.u32 %s270, 1
        %s522 = scalar_lea.sflag [#allocation4], %s521
        %s523 = sand.u32 %s270, 1
        %s524 = smul.addr %s523, 16
        %s525 = scalar_lea.vmem [#allocation14], %s524
        %p526 = scmp.lt.s32.totalorder %s32, 1
        %s527 = scalar_select %p526, %s32, 1
        %s528 = smul.addr %s527, 2
        %s529 = smul.addr %s528, 8
        %s530 = scalar_lea.vmem %s9, %s529
        %v531 = vld [vmem:[%s440] sm:$0xff]
        %v532 = vld [vmem:[%s440 + $0x8] sm:$0xff]
        %v533 = vld [vmem:[%s449] sm:$0xff]
        %v534 = vld [vmem:[%s449 + $0x8] sm:$0xff]
        %v535 = vld [vmem:[%s458] sm:$0xff]
        %v536 = vld [vmem:[%s458 + $0x8] sm:$0xff]
        %v537 = vld [vmem:[#allocation8] sm:$0xff]
        %v538 = vld [vmem:[#allocation8 + $0x8] sm:$0xff]
        %v539 = vld [vmem:[#allocation8 + $0x10] sm:$0xff]
        %v540 = vld [vmem:[#allocation8 + $0x18] sm:$0xff]
        %v541 = vld [vmem:[#allocation8 + $0x20] sm:$0xff]
        %v542 = vld [vmem:[#allocation8 + $0x28] sm:$0xff]
        %v543 = vld [vmem:[#allocation8 + $0x30] sm:$0xff]
        %v544 = vld [vmem:[#allocation8 + $0x38] sm:$0xff]
        %v545 = vld [vmem:[%s6] sm:$0x1]
        %v547 = vlaneseq
        %v548 = vshrl.u32 %v547, 7
        %v549 = vsub.s32 0, %v548
        %v550 = vrot.slane %v545, %v549
        %vm552 = vcmask 523264
        %v554 = vsel %vm552, %v531, 0
        %v557 = vsel %vm552, %v532, 0
        %559 = vmatprep.subr.mxu0 0.0
        %560 = vmatpush1.msra.mxu0 %v537
        %561 = vmatprep.subr.mxu0 0.0
        %562 = vmatpush1.msra.mxu0 %v538
        %563 = vmatprep.subr.mxu0 0.0
        %564 = vmatpush1.msra.mxu0 %v539
        %565 = vmatprep.subr.mxu0 0.0
        %566 = vmatpush1.msra.mxu0 %v540
        %567 = vmatprep.subr.mxu0 0.0
        %568 = vmatpush1.msra.mxu0 %v541
        %569 = vmatprep.subr.mxu0 0.0
        %570 = vmatpush1.msra.mxu0 %v542
        %571 = vmatprep.subr.mxu0 0.0
        %572 = vmatpush1.msra.mxu0 %v543
        %573 = vmatprep.subr.mxu0 0.0
        %574 = vmatpush1.msra.mxu0 %v544
        %575 = vmatprep.subr.mxu0 0.0
        %576 = vmatpush1.msra.mxu0 0.0
        %577 = vmatprep.subr.mxu0 0.0
        %578 = vmatpush1.msra.mxu0 0.0
        %579 = vmatprep.subr.mxu0 0.0
        %580 = vmatpush1.msra.mxu0 0.0
        %581 = vmatprep.subr.mxu0 0.0
        %582 = vmatpush1.msra.mxu0 0.0
        %583 = vmatprep.subr.mxu0 0.0
        %584 = vmatpush1.msra.mxu0 0.0
        %585 = vmatprep.subr.mxu0 0.0
        %586 = vmatpush1.msra.mxu0 0.0
        %587 = vmatprep.subr.mxu0 0.0
        %588 = vmatpush1.msra.mxu0 0.0
        %589 = vmatprep.subr.mxu0 0.0
        %590 = vmatpush1.msra.mxu0 0.0
        %591 = vmatprep.subr.mxu0 0.0
        %592 = vmatpush1.msra.mxu0 0.0
        %593 = vmatprep.subr.mxu0 0.0
        %594 = vmatpush1.msra.mxu0 0.0
        %595 = vmatprep.subr.mxu0 0.0
        %596 = vmatpush1.msra.mxu0 0.0
        %597 = vmatprep.subr.mxu0 0.0
        %598 = vmatpush1.msra.mxu0 0.0
        %599 = vmatprep.subr.mxu0 0.0
        %600 = vmatpush1.msra.mxu0 0.0
        %601 = vmatprep.subr.mxu0 0.0
        %602 = vmatpush1.msra.mxu0 0.0
        %603 = vmatprep.subr.mxu0 0.0
        %604 = vmatpush1.msra.mxu0 0.0
        %605 = vmatprep.subr.mxu0 0.0
        %606 = vmatpush1.msra.mxu0 0.0
        %607 = vmatprep.subr.mxu0 0.0
        %608 = vmatpush1.msra.mxu0 0.0
        %609 = vmatprep.subr.mxu0 0.0
        %610 = vmatpush1.msra.mxu0 0.0
        %611 = vmatprep.subr.mxu0 0.0
        %612 = vmatpush1.msra.mxu0 0.0
        %613 = vmatprep.subr.mxu0 0.0
        %614 = vmatpush1.msra.mxu0 0.0
        %615 = vmatprep.subr.mxu0 0.0
        %616 = vmatpush1.msra.mxu0 0.0
        %617 = vmatprep.subr.mxu0 0.0
        %618 = vmatpush1.msra.mxu0 0.0
        %619 = vmatprep.subr.mxu0 0.0
        %620 = vmatpush1.msra.mxu0 0.0
        %621 = vmatprep.subr.mxu0 0.0
        %622 = vmatpush1.msra.mxu0 0.0
        %623 = vmatprep.mubr.f32.mxu0 0.0
        %624 = vmatmul.mubr.f32.gmra.mrb[0].mxu0 %v554
        %v625 = vpop.f32.mrb[0].mxu0
        %v626 = vadd.f32 %v550, %v625
        %v627 = vpop.f32.mrb[0].mxu0
        %628 = vmatprep.mubr.f32.mxu0 0.0
        %629 = vmatmul.mubr.f32.gmra.mrb[0].mxu0 %v557
        %v630 = vpop.f32.mrb[0].mxu0
        %v631 = vadd.f32 %v550, %v630
        %v632 = vpop.f32.mrb[0].mxu0
        %633 = vdwg.mxu0
        %v634 = vmul.f32 %v626, 0.17677669
        %v635 = vmul.f32 %v631, 0.17677669
        %v636 = vld [vmem:[#allocation10] sm:$0xff]
        %v637 = vld [vmem:[#allocation10 + $0x8] sm:$0xff]
        %v638 = vld [vmem:[#allocation10 + $0x10] sm:$0xff]
        %v639 = vld [vmem:[#allocation10 + $0x18] sm:$0xff]
        %v640 = vld [vmem:[#allocation10 + $0x20] sm:$0xff]
        %v641 = vld [vmem:[#allocation10 + $0x28] sm:$0xff]
        %v642 = vld [vmem:[#allocation10 + $0x30] sm:$0xff]
        %v643 = vld [vmem:[#allocation10 + $0x38] sm:$0xff]
        %v644 = vld [vmem:[%s7] sm:$0x1]
        %v646 = vlaneseq
        %v647 = vshrl.u32 %v646, 7
        %v648 = vsub.s32 0, %v647
        %v649 = vrot.slane %v644, %v648
        %v652 = vsel %vm552, %v533, 0
        %v655 = vsel %vm552, %v534, 0
        %657 = vmatprep.subr.mxu0 0.0
        %658 = vmatpush1.msra.mxu0 %v636
        %659 = vmatprep.subr.mxu0 0.0
        %660 = vmatpush1.msra.mxu0 %v637
        %661 = vmatprep.subr.mxu0 0.0
        %662 = vmatpush1.msra.mxu0 %v638
        %663 = vmatprep.subr.mxu0 0.0
        %664 = vmatpush1.msra.mxu0 %v639
        %665 = vmatprep.subr.mxu0 0.0
        %666 = vmatpush1.msra.mxu0 %v640
        %667 = vmatprep.subr.mxu0 0.0
        %668 = vmatpush1.msra.mxu0 %v641
        %669 = vmatprep.subr.mxu0 0.0
        %670 = vmatpush1.msra.mxu0 %v642
        %671 = vmatprep.subr.mxu0 0.0
        %672 = vmatpush1.msra.mxu0 %v643
        %673 = vmatprep.subr.mxu0 0.0
        %674 = vmatpush1.msra.mxu0 0.0
        %675 = vmatprep.subr.mxu0 0.0
        %676 = vmatpush1.msra.mxu0 0.0
        %677 = vmatprep.subr.mxu0 0.0
        %678 = vmatpush1.msra.mxu0 0.0
        %679 = vmatprep.subr.mxu0 0.0
        %680 = vmatpush1.msra.mxu0 0.0
        %681 = vmatprep.subr.mxu0 0.0
        %682 = vmatpush1.msra.mxu0 0.0
        %683 = vmatprep.subr.mxu0 0.0
        %684 = vmatpush1.msra.mxu0 0.0
        %685 = vmatprep.subr.mxu0 0.0
        %686 = vmatpush1.msra.mxu0 0.0
        %687 = vmatprep.subr.mxu0 0.0
        %688 = vmatpush1.msra.mxu0 0.0
        %689 = vmatprep.subr.mxu0 0.0
        %690 = vmatpush1.msra.mxu0 0.0
        %691 = vmatprep.subr.mxu0 0.0
        %692 = vmatpush1.msra.mxu0 0.0
        %693 = vmatprep.subr.mxu0 0.0
        %694 = vmatpush1.msra.mxu0 0.0
        %695 = vmatprep.subr.mxu0 0.0
        %696 = vmatpush1.msra.mxu0 0.0
        %697 = vmatprep.subr.mxu0 0.0
        %698 = vmatpush1.msra.mxu0 0.0
        %699 = vmatprep.subr.mxu0 0.0
        %700 = vmatpush1.msra.mxu0 0.0
        %701 = vmatprep.subr.mxu0 0.0
        %702 = vmatpush1.msra.mxu0 0.0
        %703 = vmatprep.subr.mxu0 0.0
        %704 = vmatpush1.msra.mxu0 0.0
        %705 = vmatprep.subr.mxu0 0.0
        %706 = vmatpush1.msra.mxu0 0.0
        %707 = vmatprep.subr.mxu0 0.0
        %708 = vmatpush1.msra.mxu0 0.0
        %709 = vmatprep.subr.mxu0 0.0
        %710 = vmatpush1.msra.mxu0 0.0
        %711 = vmatprep.subr.mxu0 0.0
        %712 = vmatpush1.msra.mxu0 0.0
        %713 = vmatprep.subr.mxu0 0.0
        %714 = vmatpush1.msra.mxu0 0.0
        %715 = vmatprep.subr.mxu0 0.0
        %716 = vmatpush1.msra.mxu0 0.0
        %717 = vmatprep.subr.mxu0 0.0
        %718 = vmatpush1.msra.mxu0 0.0
        %719 = vmatprep.subr.mxu0 0.0
        %720 = vmatpush1.msra.mxu0 0.0
        %721 = vmatprep.mubr.f32.mxu0 0.0
        %722 = vmatmul.mubr.f32.gmra.mrb[0].mxu0 %v652
        %v723 = vpop.f32.mrb[0].mxu0
        %v724 = vadd.f32 %v649, %v723
        %v725 = vpop.f32.mrb[0].mxu0
        %726 = vmatprep.mubr.f32.mxu0 0.0
        %727 = vmatmul.mubr.f32.gmra.mrb[0].mxu0 %v655
        %v728 = vpop.f32.mrb[0].mxu0
        %v729 = vadd.f32 %v649, %v728
        %v730 = vpop.f32.mrb[0].mxu0
        %731 = vdwg.mxu0
        %v732 = vld [vmem:[#allocation11] sm:$0xff]
        %v733 = vld [vmem:[#allocation11 + $0x8] sm:$0xff]
        %v734 = vld [vmem:[#allocation11 + $0x10] sm:$0xff]
        %v735 = vld [vmem:[#allocation11 + $0x18] sm:$0xff]
        %v736 = vld [vmem:[#allocation11 + $0x20] sm:$0xff]
        %v737 = vld [vmem:[#allocation11 + $0x28] sm:$0xff]
        %v738 = vld [vmem:[#allocation11 + $0x30] sm:$0xff]
        %v739 = vld [vmem:[#allocation11 + $0x38] sm:$0xff]
        %v740 = vld [vmem:[#allocation13] sm:$0x1]
        %v742 = vlaneseq
        %v743 = vshrl.u32 %v742, 7
        %v744 = vsub.s32 0, %v743
        %v745 = vrot.slane %v740, %v744
        %v748 = vsel %vm552, %v535, 0
        %v751 = vsel %vm552, %v536, 0
        %753 = vmatprep.subr.mxu0 0.0
        %754 = vmatpush1.msra.mxu0 %v732
        %755 = vmatprep.subr.mxu0 0.0
        %756 = vmatpush1.msra.mxu0 %v733
        %757 = vmatprep.subr.mxu0 0.0
        %758 = vmatpush1.msra.mxu0 %v734
        %759 = vmatprep.subr.mxu0 0.0
        %760 = vmatpush1.msra.mxu0 %v735
        %761 = vmatprep.subr.mxu0 0.0
        %762 = vmatpush1.msra.mxu0 %v736
        %763 = vmatprep.subr.mxu0 0.0
        %764 = vmatpush1.msra.mxu0 %v737
        %765 = vmatprep.subr.mxu0 0.0
        %766 = vmatpush1.msra.mxu0 %v738
        %767 = vmatprep.subr.mxu0 0.0
        %768 = vmatpush1.msra.mxu0 %v739
        %769 = vmatprep.subr.mxu0 0.0
        %770 = vmatpush1.msra.mxu0 0.0
        %771 = vmatprep.subr.mxu0 0.0
        %772 = vmatpush1.msra.mxu0 0.0
        %773 = vmatprep.subr.mxu0 0.0
        %774 = vmatpush1.msra.mxu0 0.0
        %775 = vmatprep.subr.mxu0 0.0
        %776 = vmatpush1.msra.mxu0 0.0
        %777 = vmatprep.subr.mxu0 0.0
        %778 = vmatpush1.msra.mxu0 0.0
        %779 = vmatprep.subr.mxu0 0.0
        %780 = vmatpush1.msra.mxu0 0.0
        %781 = vmatprep.subr.mxu0 0.0
        %782 = vmatpush1.msra.mxu0 0.0
        %783 = vmatprep.subr.mxu0 0.0
        %784 = vmatpush1.msra.mxu0 0.0
        %785 = vmatprep.subr.mxu0 0.0
        %786 = vmatpush1.msra.mxu0 0.0
        %787 = vmatprep.subr.mxu0 0.0
        %788 = vmatpush1.msra.mxu0 0.0
        %789 = vmatprep.subr.mxu0 0.0
        %790 = vmatpush1.msra.mxu0 0.0
        %791 = vmatprep.subr.mxu0 0.0
        %792 = vmatpush1.msra.mxu0 0.0
        %793 = vmatprep.subr.mxu0 0.0
        %794 = vmatpush1.msra.mxu0 0.0
        %795 = vmatprep.subr.mxu0 0.0
        %796 = vmatpush1.msra.mxu0 0.0
        %797 = vmatprep.subr.mxu0 0.0
        %798 = vmatpush1.msra.mxu0 0.0
        %799 = vmatprep.subr.mxu0 0.0
        %800 = vmatpush1.msra.mxu0 0.0
        %801 = vmatprep.subr.mxu0 0.0
        %802 = vmatpush1.msra.mxu0 0.0
        %803 = vmatprep.subr.mxu0 0.0
        %804 = vmatpush1.msra.mxu0 0.0
        %805 = vmatprep.subr.mxu0 0.0
        %806 = vmatpush1.msra.mxu0 0.0
        %807 = vmatprep.subr.mxu0 0.0
        %808 = vmatpush1.msra.mxu0 0.0
        %809 = vmatprep.subr.mxu0 0.0
        %810 = vmatpush1.msra.mxu0 0.0
        %811 = vmatprep.subr.mxu0 0.0
        %812 = vmatpush1.msra.mxu0 0.0
        %813 = vmatprep.subr.mxu0 0.0
        %814 = vmatpush1.msra.mxu0 0.0
        %815 = vmatprep.subr.mxu0 0.0
        %816 = vmatpush1.msra.mxu0 0.0
        %817 = vmatprep.mubr.f32.mxu0 0.0
        %818 = vmatmul.mubr.f32.gmra.mrb[0].mxu0 %v748
        %v819 = vpop.f32.mrb[0].mxu0
        %v820 = vadd.f32 %v745, %v819
        %v821 = vpop.f32.mrb[0].mxu0
        %822 = vmatprep.mubr.f32.mxu0 0.0
        %823 = vmatmul.mubr.f32.gmra.mrb[0].mxu0 %v751
        %v824 = vpop.f32.mrb[0].mxu0
        %v825 = vadd.f32 %v745, %v824
        %v826 = vpop.f32.mrb[0].mxu0
        %827 = vdwg.mxu0
        %v828 = vld [vmem:[%s530] sm:$0xff]
        %v829 = vld [vmem:[%s530 + $0x8] sm:$0xff]
        %vm830 = vcmask 261120
        %v832 = vsel %vm830, %v634, 0
        %v835 = vsel %vm830, %v635, 0
        %v838 = vsel %vm830, %v724, 0
        %v841 = vsel %vm830, %v729, 0
        %843 = vmatprep.subr.mxu0 0.0
        %844 = vmatpush1.xpose.msra.mxu0 %v838
        %845 = vmatprep.subr.mxu0 0.0
        %846 = vmatpush1.xpose.msra.mxu0 %v841
        %847 = vmatprep.subr.mxu0 0.0
        %848 = vmatpush1.xpose.msra.mxu0 0.0
        %849 = vmatprep.subr.mxu0 0.0
        %850 = vmatpush1.xpose.msra.mxu0 0.0
        %851 = vmatprep.subr.mxu0 0.0
        %852 = vmatpush1.xpose.msra.mxu0 0.0
        %853 = vmatprep.subr.mxu0 0.0
        %854 = vmatpush1.xpose.msra.mxu0 0.0
        %855 = vmatprep.subr.mxu0 0.0
        %856 = vmatpush1.xpose.msra.mxu0 0.0
        %857 = vmatprep.subr.mxu0 0.0
        %858 = vmatpush1.xpose.msra.mxu0 0.0
        %859 = vmatprep.subr.mxu0 0.0
        %860 = vmatpush1.xpose.msra.mxu0 0.0
        %861 = vmatprep.subr.mxu0 0.0
        %862 = vmatpush1.xpose.msra.mxu0 0.0
        %863 = vmatprep.subr.mxu0 0.0
        %864 = vmatpush1.xpose.msra.mxu0 0.0
        %865 = vmatprep.subr.mxu0 0.0
        %866 = vmatpush1.xpose.msra.mxu0 0.0
        %867 = vmatprep.subr.mxu0 0.0
        %868 = vmatpush1.xpose.msra.mxu0 0.0
        %869 = vmatprep.subr.mxu0 0.0
        %870 = vmatpush1.xpose.msra.mxu0 0.0
        %871 = vmatprep.subr.mxu0 0.0
        %872 = vmatpush1.xpose.msra.mxu0 0.0
        %873 = vmatprep.subr.mxu0 0.0
        %874 = vmatpush1.xpose.msra.mxu0 0.0
        %875 = vmatprep.subr.mxu0 0.0
        %876 = vmatpush1.xpose.msra.mxu0 0.0
        %877 = vmatprep.subr.mxu0 0.0
        %878 = vmatpush1.xpose.msra.mxu0 0.0
        %879 = vmatprep.subr.mxu0 0.0
        %880 = vmatpush1.xpose.msra.mxu0 0.0
        %881 = vmatprep.subr.mxu0 0.0
        %882 = vmatpush1.xpose.msra.mxu0 0.0
        %883 = vmatprep.subr.mxu0 0.0
        %884 = vmatpush1.xpose.msra.mxu0 0.0
        %885 = vmatprep.subr.mxu0 0.0
        %886 = vmatpush1.xpose.msra.mxu0 0.0
        %887 = vmatprep.subr.mxu0 0.0
        %888 = vmatpush1.xpose.msra.mxu0 0.0
        %889 = vmatprep.subr.mxu0 0.0
        %890 = vmatpush1.xpose.msra.mxu0 0.0
        %891 = vmatprep.subr.mxu0 0.0
        %892 = vmatpush1.xpose.msra.mxu0 0.0
        %893 = vmatprep.subr.mxu0 0.0
        %894 = vmatpush1.xpose.msra.mxu0 0.0
        %895 = vmatprep.subr.mxu0 0.0
        %896 = vmatpush1.xpose.msra.mxu0 0.0
        %897 = vmatprep.subr.mxu0 0.0
        %898 = vmatpush1.xpose.msra.mxu0 0.0
        %899 = vmatprep.subr.mxu0 0.0
        %900 = vmatpush1.xpose.msra.mxu0 0.0
        %901 = vmatprep.subr.mxu0 0.0
        %902 = vmatpush1.xpose.msra.mxu0 0.0
        %903 = vmatprep.subr.mxu0 0.0
        %904 = vmatpush1.xpose.msra.mxu0 0.0
        %905 = vmatprep.subr.mxu0 0.0
        %906 = vmatpush1.xpose.msra.mxu0 0.0
        %907 = vmatprep.mubr.f32.mxu0 0.0
        %908 = vmatmul.mubr.f32.gmra.mrb[0].mxu0 %v832
        %v909 = vpop.f32.mrb[0].mxu0
        %v910 = vadd.f32 %v828, %v909
        %v911 = vpop.f32.mrb[0].mxu0
        %912 = vmatprep.mubr.f32.mxu0 0.0
        %913 = vmatmul.mubr.f32.gmra.mrb[0].mxu0 %v835
        %v914 = vpop.f32.mrb[0].mxu0
        %v915 = vadd.f32 %v829, %v914
        %v916 = vpop.f32.mrb[0].mxu0
        %917 = vdwg.mxu0
        %vm918 = vcmask 130048
        %v919 = vsel %vm918, %v910, -inf
        %920 = vmax.xlane.f32.xlu0 %v919
        %v921 = vpop.xlane.xlu0 %920
        %v922 = vsel %vm918, %v915, -inf
        %923 = vmax.xlane.f32.xlu0 %v922
        %v924 = vpop.xlane.xlu0 %923
        %v925 = vsub.f32 %v910, %v921
        %v926 = vsub.f32 %v915, %v924
        %v927 = vmul.f32 %v925, 1.442695
        %v928 = vpow.pop %v927
        %v929 = vmul.f32 %v926, 1.442695
        %v930 = vpow.pop %v929
        %v931 = vsel %vm918, %v928, 0.0
        %932 = vadd.xlane.f32.xlu0 %v931
        %v933 = vpop.xlane.xlu0 %932
        %v934 = vsel %vm918, %v930, 0.0
        %935 = vadd.xlane.f32.xlu0 %v934
        %v936 = vpop.xlane.xlu0 %935
        %v937 = vrcp.pop %v933
        %v938 = vrcp.pop %v936
        %v940 = vsel %vm918, %v928, 0
        %v943 = vsel %vm918, %v930, 0
        %945 = vmatprep.subr.mxu0 0.0
        %946 = vmatpush1.msra.mxu0 %v820
        %947 = vmatprep.subr.mxu0 0.0
        %948 = vmatpush1.msra.mxu0 %v825
        %949 = vmatprep.subr.mxu0 0.0
        %950 = vmatpush1.msra.mxu0 0.0
        %951 = vmatprep.subr.mxu0 0.0
        %952 = vmatpush1.msra.mxu0 0.0
        %953 = vmatprep.subr.mxu0 0.0
        %954 = vmatpush1.msra.mxu0 0.0
        %955 = vmatprep.subr.mxu0 0.0
        %956 = vmatpush1.msra.mxu0 0.0
        %957 = vmatprep.subr.mxu0 0.0
        %958 = vmatpush1.msra.mxu0 0.0
        %959 = vmatprep.subr.mxu0 0.0
        %960 = vmatpush1.msra.mxu0 0.0
        %961 = vmatprep.subr.mxu0 0.0
        %962 = vmatpush1.msra.mxu0 0.0
        %963 = vmatprep.subr.mxu0 0.0
        %964 = vmatpush1.msra.mxu0 0.0
        %965 = vmatprep.subr.mxu0 0.0
        %966 = vmatpush1.msra.mxu0 0.0
        %967 = vmatprep.subr.mxu0 0.0
        %968 = vmatpush1.msra.mxu0 0.0
        %969 = vmatprep.subr.mxu0 0.0
        %970 = vmatpush1.msra.mxu0 0.0
        %971 = vmatprep.subr.mxu0 0.0
        %972 = vmatpush1.msra.mxu0 0.0
        %973 = vmatprep.subr.mxu0 0.0
        %974 = vmatpush1.msra.mxu0 0.0
        %975 = vmatprep.subr.mxu0 0.0
        %976 = vmatpush1.msra.mxu0 0.0
        %977 = vmatprep.subr.mxu0 0.0
        %978 = vmatpush1.msra.mxu0 0.0
        %979 = vmatprep.subr.mxu0 0.0
        %980 = vmatpush1.msra.mxu0 0.0
        %981 = vmatprep.subr.mxu0 0.0
        %982 = vmatpush1.msra.mxu0 0.0
        %983 = vmatprep.subr.mxu0 0.0
        %984 = vmatpush1.msra.mxu0 0.0
        %985 = vmatprep.subr.mxu0 0.0
        %986 = vmatpush1.msra.mxu0 0.0
        %987 = vmatprep.subr.mxu0 0.0
        %988 = vmatpush1.msra.mxu0 0.0
        %989 = vmatprep.subr.mxu0 0.0
        %990 = vmatpush1.msra.mxu0 0.0
        %991 = vmatprep.subr.mxu0 0.0
        %992 = vmatpush1.msra.mxu0 0.0
        %993 = vmatprep.subr.mxu0 0.0
        %994 = vmatpush1.msra.mxu0 0.0
        %995 = vmatprep.subr.mxu0 0.0
        %996 = vmatpush1.msra.mxu0 0.0
        %997 = vmatprep.subr.mxu0 0.0
        %998 = vmatpush1.msra.mxu0 0.0
        %999 = vmatprep.subr.mxu0 0.0
        %1000 = vmatpush1.msra.mxu0 0.0
        %1001 = vmatprep.subr.mxu0 0.0
        %1002 = vmatpush1.msra.mxu0 0.0
        %1003 = vmatprep.subr.mxu0 0.0
        %1004 = vmatpush1.msra.mxu0 0.0
        %1005 = vmatprep.subr.mxu0 0.0
        %1006 = vmatpush1.msra.mxu0 0.0
        %1007 = vmatprep.subr.mxu0 0.0
        %1008 = vmatpush1.msra.mxu0 0.0
        %1009 = vmatprep.mubr.f32.mxu0 0.0
        %1010 = vmatmul.mubr.f32.gmra.mrb[0].mxu0 %v940
        %v1011 = vpop.f32.mrb[0].mxu0
        %v1012 = vadd.f32 0.0, %v1011
        %v1013 = vpop.f32.mrb[0].mxu0
        %1014 = vmatprep.mubr.f32.mxu0 0.0
        %1015 = vmatmul.mubr.f32.gmra.mrb[0].mxu0 %v943
        %v1016 = vpop.f32.mrb[0].mxu0
        %v1017 = vadd.f32 0.0, %v1016
        %v1018 = vpop.f32.mrb[0].mxu0
        %1019 = vdwg.mxu0
        %v1020 = vmul.f32 %v1012, %v937
        %v1021 = vmul.f32 %v1017, %v938
        %1022 = vrot.lane.b32.xlu0 %v634, 96
        %v1023 = vpop.permute.xlu0 %1022
        %1024 = vrot.lane.b32.xlu0 %v635, 96
        %v1025 = vpop.permute.xlu0 %1024
        %1026 = vrot.lane.b32.xlu0 %v724, 96
        %v1027 = vpop.permute.xlu0 %1026
        %1028 = vrot.lane.b32.xlu0 %v729, 96
        %v1029 = vpop.permute.xlu0 %1028
        %v1030 = vsel %vm830, %v1023, 0
        %v1032 = vsel %vm830, %v1025, 0
        %v1034 = vsel %vm830, %v1027, 0
        %v1036 = vsel %vm830, %v1029, 0
        %1038 = vmatprep.subr.mxu0 0.0
        %1039 = vmatpush1.xpose.msra.mxu0 %v1034
        %1040 = vmatprep.subr.mxu0 0.0
        %1041 = vmatpush1.xpose.msra.mxu0 %v1036
        %1042 = vmatprep.subr.mxu0 0.0
        %1043 = vmatpush1.xpose.msra.mxu0 0.0
        %1044 = vmatprep.subr.mxu0 0.0
        %1045 = vmatpush1.xpose.msra.mxu0 0.0
        %1046 = vmatprep.subr.mxu0 0.0
        %1047 = vmatpush1.xpose.msra.mxu0 0.0
        %1048 = vmatprep.subr.mxu0 0.0
        %1049 = vmatpush1.xpose.msra.mxu0 0.0
        %1050 = vmatprep.subr.mxu0 0.0
        %1051 = vmatpush1.xpose.msra.mxu0 0.0
        %1052 = vmatprep.subr.mxu0 0.0
        %1053 = vmatpush1.xpose.msra.mxu0 0.0
        %1054 = vmatprep.subr.mxu0 0.0
        %1055 = vmatpush1.xpose.msra.mxu0 0.0
        %1056 = vmatprep.subr.mxu0 0.0
        %1057 = vmatpush1.xpose.msra.mxu0 0.0
        %1058 = vmatprep.subr.mxu0 0.0
        %1059 = vmatpush1.xpose.msra.mxu0 0.0
        %1060 = vmatprep.subr.mxu0 0.0
        %1061 = vmatpush1.xpose.msra.mxu0 0.0
        %1062 = vmatprep.subr.mxu0 0.0
        %1063 = vmatpush1.xpose.msra.mxu0 0.0
        %1064 = vmatprep.subr.mxu0 0.0
        %1065 = vmatpush1.xpose.msra.mxu0 0.0
        %1066 = vmatprep.subr.mxu0 0.0
        %1067 = vmatpush1.xpose.msra.mxu0 0.0
        %1068 = vmatprep.subr.mxu0 0.0
        %1069 = vmatpush1.xpose.msra.mxu0 0.0
        %1070 = vmatprep.subr.mxu0 0.0
        %1071 = vmatpush1.xpose.msra.mxu0 0.0
        %1072 = vmatprep.subr.mxu0 0.0
        %1073 = vmatpush1.xpose.msra.mxu0 0.0
        %1074 = vmatprep.subr.mxu0 0.0
        %1075 = vmatpush1.xpose.msra.mxu0 0.0
        %1076 = vmatprep.subr.mxu0 0.0
        %1077 = vmatpush1.xpose.msra.mxu0 0.0
        %1078 = vmatprep.subr.mxu0 0.0
        %1079 = vmatpush1.xpose.msra.mxu0 0.0
        %1080 = vmatprep.subr.mxu0 0.0
        %1081 = vmatpush1.xpose.msra.mxu0 0.0
        %1082 = vmatprep.subr.mxu0 0.0
        %1083 = vmatpush1.xpose.msra.mxu0 0.0
        %1084 = vmatprep.subr.mxu0 0.0
        %1085 = vmatpush1.xpose.msra.mxu0 0.0
        %1086 = vmatprep.subr.mxu0 0.0
        %1087 = vmatpush1.xpose.msra.mxu0 0.0
        %1088 = vmatprep.subr.mxu0 0.0
        %1089 = vmatpush1.xpose.msra.mxu0 0.0
        %1090 = vmatprep.subr.mxu0 0.0
        %1091 = vmatpush1.xpose.msra.mxu0 0.0
        %1092 = vmatprep.subr.mxu0 0.0
        %1093 = vmatpush1.xpose.msra.mxu0 0.0
        %1094 = vmatprep.subr.mxu0 0.0
        %1095 = vmatpush1.xpose.msra.mxu0 0.0
        %1096 = vmatprep.subr.mxu0 0.0
        %1097 = vmatpush1.xpose.msra.mxu0 0.0
        %1098 = vmatprep.subr.mxu0 0.0
        %1099 = vmatpush1.xpose.msra.mxu0 0.0
        %1100 = vmatprep.subr.mxu0 0.0
        %1101 = vmatpush1.xpose.msra.mxu0 0.0
        %1102 = vmatprep.mubr.f32.mxu0 0.0
        %1103 = vmatmul.mubr.f32.gmra.mrb[0].mxu0 %v1030
        %v1104 = vpop.f32.mrb[0].mxu0
        %v1105 = vadd.f32 %v828, %v1104
        %v1106 = vpop.f32.mrb[0].mxu0
        %1107 = vmatprep.mubr.f32.mxu0 0.0
        %1108 = vmatmul.mubr.f32.gmra.mrb[0].mxu0 %v1032
        %v1109 = vpop.f32.mrb[0].mxu0
        %v1110 = vadd.f32 %v829, %v1109
        %v1111 = vpop.f32.mrb[0].mxu0
        %1112 = vdwg.mxu0
        %v1113 = vsel %vm918, %v1105, -inf
        %1114 = vmax.xlane.f32.xlu0 %v1113
        %v1115 = vpop.xlane.xlu0 %1114
        %v1116 = vsel %vm918, %v1110, -inf
        %1117 = vmax.xlane.f32.xlu0 %v1116
        %v1118 = vpop.xlane.xlu0 %1117
        %v1119 = vsub.f32 %v1105, %v1115
        %v1120 = vsub.f32 %v1110, %v1118
        %v1121 = vmul.f32 %v1119, 1.442695
        %v1122 = vpow.pop %v1121
        %v1123 = vmul.f32 %v1120, 1.442695
        %v1124 = vpow.pop %v1123
        %v1125 = vsel %vm918, %v1122, 0.0
        %1126 = vadd.xlane.f32.xlu0 %v1125
        %v1127 = vpop.xlane.xlu0 %1126
        %v1128 = vsel %vm918, %v1124, 0.0
        %1129 = vadd.xlane.f32.xlu0 %v1128
        %v1130 = vpop.xlane.xlu0 %1129
        %v1131 = vrcp.pop %v1127
        %v1132 = vrcp.pop %v1130
        %1135 = vrot.lane.b32.xlu0 %v820, 96
        %v1136 = vpop.permute.xlu0 %1135
        %1137 = vrot.lane.b32.xlu0 %v825, 96
        %v1138 = vpop.permute.xlu0 %1137
        %v1142 = vsel %vm918, %v1122, 0
        %v1145 = vsel %vm918, %v1124, 0
        %1147 = vmatprep.subr.mxu0 0.0
        %1148 = vmatpush1.msra.mxu0 %v1136
        %1149 = vmatprep.subr.mxu0 0.0
        %1150 = vmatpush1.msra.mxu0 %v1138
        %1151 = vmatprep.subr.mxu0 0.0
        %1152 = vmatpush1.msra.mxu0 0.0
        %1153 = vmatprep.subr.mxu0 0.0
        %1154 = vmatpush1.msra.mxu0 0.0
        %1155 = vmatprep.subr.mxu0 0.0
        %1156 = vmatpush1.msra.mxu0 0.0
        %1157 = vmatprep.subr.mxu0 0.0
        %1158 = vmatpush1.msra.mxu0 0.0
        %1159 = vmatprep.subr.mxu0 0.0
        %1160 = vmatpush1.msra.mxu0 0.0
        %1161 = vmatprep.subr.mxu0 0.0
        %1162 = vmatpush1.msra.mxu0 0.0
        %1163 = vmatprep.subr.mxu0 0.0
        %1164 = vmatpush1.msra.mxu0 0.0
        %1165 = vmatprep.subr.mxu0 0.0
        %1166 = vmatpush1.msra.mxu0 0.0
        %1167 = vmatprep.subr.mxu0 0.0
        %1168 = vmatpush1.msra.mxu0 0.0
        %1169 = vmatprep.subr.mxu0 0.0
        %1170 = vmatpush1.msra.mxu0 0.0
        %1171 = vmatprep.subr.mxu0 0.0
        %1172 = vmatpush1.msra.mxu0 0.0
        %1173 = vmatprep.subr.mxu0 0.0
        %1174 = vmatpush1.msra.mxu0 0.0
        %1175 = vmatprep.subr.mxu0 0.0
        %1176 = vmatpush1.msra.mxu0 0.0
        %1177 = vmatprep.subr.mxu0 0.0
        %1178 = vmatpush1.msra.mxu0 0.0
        %1179 = vmatprep.subr.mxu0 0.0
        %1180 = vmatpush1.msra.mxu0 0.0
        %1181 = vmatprep.subr.mxu0 0.0
        %1182 = vmatpush1.msra.mxu0 0.0
        %1183 = vmatprep.subr.mxu0 0.0
        %1184 = vmatpush1.msra.mxu0 0.0
        %1185 = vmatprep.subr.mxu0 0.0
        %1186 = vmatpush1.msra.mxu0 0.0
        %1187 = vmatprep.subr.mxu0 0.0
        %1188 = vmatpush1.msra.mxu0 0.0
        %1189 = vmatprep.subr.mxu0 0.0
        %1190 = vmatpush1.msra.mxu0 0.0
        %1191 = vmatprep.subr.mxu0 0.0
        %1192 = vmatpush1.msra.mxu0 0.0
        %1193 = vmatprep.subr.mxu0 0.0
        %1194 = vmatpush1.msra.mxu0 0.0
        %1195 = vmatprep.subr.mxu0 0.0
        %1196 = vmatpush1.msra.mxu0 0.0
        %1197 = vmatprep.subr.mxu0 0.0
        %1198 = vmatpush1.msra.mxu0 0.0
        %1199 = vmatprep.subr.mxu0 0.0
        %1200 = vmatpush1.msra.mxu0 0.0
        %1201 = vmatprep.subr.mxu0 0.0
        %1202 = vmatpush1.msra.mxu0 0.0
        %1203 = vmatprep.subr.mxu0 0.0
        %1204 = vmatpush1.msra.mxu0 0.0
        %1205 = vmatprep.subr.mxu0 0.0
        %1206 = vmatpush1.msra.mxu0 0.0
        %1207 = vmatprep.subr.mxu0 0.0
        %1208 = vmatpush1.msra.mxu0 0.0
        %1209 = vmatprep.subr.mxu0 0.0
        %1210 = vmatpush1.msra.mxu0 0.0
        %1211 = vmatprep.mubr.f32.mxu0 0.0
        %1212 = vmatmul.mubr.f32.gmra.mrb[0].mxu0 %v1142
        %v1213 = vpop.f32.mrb[0].mxu0
        %v1214 = vadd.f32 0.0, %v1213
        %v1215 = vpop.f32.mrb[0].mxu0
        %1216 = vmatprep.mubr.f32.mxu0 0.0
        %1217 = vmatmul.mubr.f32.gmra.mrb[0].mxu0 %v1145
        %v1218 = vpop.f32.mrb[0].mxu0
        %v1219 = vadd.f32 0.0, %v1218
        %v1220 = vpop.f32.mrb[0].mxu0
        %1221 = vdwg.mxu0
        %v1222 = vmul.f32 %v1214, %v1131
        %v1223 = vmul.f32 %v1219, %v1132
        %1224 = vrot.lane.b32.xlu0 %v634, 64
        %v1225 = vpop.permute.xlu0 %1224
        %1226 = vrot.lane.b32.xlu0 %v635, 64
        %v1227 = vpop.permute.xlu0 %1226
        %1228 = vrot.lane.b32.xlu0 %v724, 64
        %v1229 = vpop.permute.xlu0 %1228
        %1230 = vrot.lane.b32.xlu0 %v729, 64
        %v1231 = vpop.permute.xlu0 %1230
        %v1232 = vsel %vm830, %v1225, 0
        %v1234 = vsel %vm830, %v1227, 0
        %v1236 = vsel %vm830, %v1229, 0
        %v1238 = vsel %vm830, %v1231, 0
        %1240 = vmatprep.subr.mxu0 0.0
        %1241 = vmatpush1.xpose.msra.mxu0 %v1236
        %1242 = vmatprep.subr.mxu0 0.0
        %1243 = vmatpush1.xpose.msra.mxu0 %v1238
        %1244 = vmatprep.subr.mxu0 0.0
        %1245 = vmatpush1.xpose.msra.mxu0 0.0
        %1246 = vmatprep.subr.mxu0 0.0
        %1247 = vmatpush1.xpose.msra.mxu0 0.0
        %1248 = vmatprep.subr.mxu0 0.0
        %1249 = vmatpush1.xpose.msra.mxu0 0.0
        %1250 = vmatprep.subr.mxu0 0.0
        %1251 = vmatpush1.xpose.msra.mxu0 0.0
        %1252 = vmatprep.subr.mxu0 0.0
        %1253 = vmatpush1.xpose.msra.mxu0 0.0
        %1254 = vmatprep.subr.mxu0 0.0
        %1255 = vmatpush1.xpose.msra.mxu0 0.0
        %1256 = vmatprep.subr.mxu0 0.0
        %1257 = vmatpush1.xpose.msra.mxu0 0.0
        %1258 = vmatprep.subr.mxu0 0.0
        %1259 = vmatpush1.xpose.msra.mxu0 0.0
        %1260 = vmatprep.subr.mxu0 0.0
        %1261 = vmatpush1.xpose.msra.mxu0 0.0
        %1262 = vmatprep.subr.mxu0 0.0
        %1263 = vmatpush1.xpose.msra.mxu0 0.0
        %1264 = vmatprep.subr.mxu0 0.0
        %1265 = vmatpush1.xpose.msra.mxu0 0.0
        %1266 = vmatprep.subr.mxu0 0.0
        %1267 = vmatpush1.xpose.msra.mxu0 0.0
        %1268 = vmatprep.subr.mxu0 0.0
        %1269 = vmatpush1.xpose.msra.mxu0 0.0
        %1270 = vmatprep.subr.mxu0 0.0
        %1271 = vmatpush1.xpose.msra.mxu0 0.0
        %1272 = vmatprep.subr.mxu0 0.0
        %1273 = vmatpush1.xpose.msra.mxu0 0.0
        %1274 = vmatprep.subr.mxu0 0.0
        %1275 = vmatpush1.xpose.msra.mxu0 0.0
        %1276 = vmatprep.subr.mxu0 0.0
        %1277 = vmatpush1.xpose.msra.mxu0 0.0
        %1278 = vmatprep.subr.mxu0 0.0
        %1279 = vmatpush1.xpose.msra.mxu0 0.0
        %1280 = vmatprep.subr.mxu0 0.0
        %1281 = vmatpush1.xpose.msra.mxu0 0.0
        %1282 = vmatprep.subr.mxu0 0.0
        %1283 = vmatpush1.xpose.msra.mxu0 0.0
        %1284 = vmatprep.subr.mxu0 0.0
        %1285 = vmatpush1.xpose.msra.mxu0 0.0
        %1286 = vmatprep.subr.mxu0 0.0
        %1287 = vmatpush1.xpose.msra.mxu0 0.0
        %1288 = vmatprep.subr.mxu0 0.0
        %1289 = vmatpush1.xpose.msra.mxu0 0.0
        %1290 = vmatprep.subr.mxu0 0.0
        %1291 = vmatpush1.xpose.msra.mxu0 0.0
        %1292 = vmatprep.subr.mxu0 0.0
        %1293 = vmatpush1.xpose.msra.mxu0 0.0
        %1294 = vmatprep.subr.mxu0 0.0
        %1295 = vmatpush1.xpose.msra.mxu0 0.0
        %1296 = vmatprep.subr.mxu0 0.0
        %1297 = vmatpush1.xpose.msra.mxu0 0.0
        %1298 = vmatprep.subr.mxu0 0.0
        %1299 = vmatpush1.xpose.msra.mxu0 0.0
        %1300 = vmatprep.subr.mxu0 0.0
        %1301 = vmatpush1.xpose.msra.mxu0 0.0
        %1302 = vmatprep.subr.mxu0 0.0
        %1303 = vmatpush1.xpose.msra.mxu0 0.0
        %1304 = vmatprep.mubr.f32.mxu0 0.0
        %1305 = vmatmul.mubr.f32.gmra.mrb[0].mxu0 %v1232
        %v1306 = vpop.f32.mrb[0].mxu0
        %v1307 = vadd.f32 %v828, %v1306
        %v1308 = vpop.f32.mrb[0].mxu0
        %1309 = vmatprep.mubr.f32.mxu0 0.0
        %1310 = vmatmul.mubr.f32.gmra.mrb[0].mxu0 %v1234
        %v1311 = vpop.f32.mrb[0].mxu0
        %v1312 = vadd.f32 %v829, %v1311
        %v1313 = vpop.f32.mrb[0].mxu0
        %1314 = vdwg.mxu0
        %v1315 = vsel %vm918, %v1307, -inf
        %1316 = vmax.xlane.f32.xlu0 %v1315
        %v1317 = vpop.xlane.xlu0 %1316
        %v1318 = vsel %vm918, %v1312, -inf
        %1319 = vmax.xlane.f32.xlu0 %v1318
        %v1320 = vpop.xlane.xlu0 %1319
        %v1321 = vsub.f32 %v1307, %v1317
        %v1322 = vsub.f32 %v1312, %v1320
        %v1323 = vmul.f32 %v1321, 1.442695
        %v1324 = vpow.pop %v1323
        %v1325 = vmul.f32 %v1322, 1.442695
        %v1326 = vpow.pop %v1325
        %v1327 = vsel %vm918, %v1324, 0.0
        %1328 = vadd.xlane.f32.xlu0 %v1327
        %v1329 = vpop.xlane.xlu0 %1328
        %v1330 = vsel %vm918, %v1326, 0.0
        %1331 = vadd.xlane.f32.xlu0 %v1330
        %v1332 = vpop.xlane.xlu0 %1331
        %v1333 = vrcp.pop %v1329
        %v1334 = vrcp.pop %v1332
        %1335 = vrot.lane.b32.xlu0 %v820, 64
        %v1336 = vpop.permute.xlu0 %1335
        %1337 = vrot.lane.b32.xlu0 %v825, 64
        %v1338 = vpop.permute.xlu0 %1337
        %v1342 = vsel %vm918, %v1324, 0
        %v1345 = vsel %vm918, %v1326, 0
        %1347 = vmatprep.subr.mxu0 0.0
        %1348 = vmatpush1.msra.mxu0 %v1336
        %1349 = vmatprep.subr.mxu0 0.0
        %1350 = vmatpush1.msra.mxu0 %v1338
        %1351 = vmatprep.subr.mxu0 0.0
        %1352 = vmatpush1.msra.mxu0 0.0
        %1353 = vmatprep.subr.mxu0 0.0
        %1354 = vmatpush1.msra.mxu0 0.0
        %1355 = vmatprep.subr.mxu0 0.0
        %1356 = vmatpush1.msra.mxu0 0.0
        %1357 = vmatprep.subr.mxu0 0.0
        %1358 = vmatpush1.msra.mxu0 0.0
        %1359 = vmatprep.subr.mxu0 0.0
        %1360 = vmatpush1.msra.mxu0 0.0
        %1361 = vmatprep.subr.mxu0 0.0
        %1362 = vmatpush1.msra.mxu0 0.0
        %1363 = vmatprep.subr.mxu0 0.0
        %1364 = vmatpush1.msra.mxu0 0.0
        %1365 = vmatprep.subr.mxu0 0.0
        %1366 = vmatpush1.msra.mxu0 0.0
        %1367 = vmatprep.subr.mxu0 0.0
        %1368 = vmatpush1.msra.mxu0 0.0
        %1369 = vmatprep.subr.mxu0 0.0
        %1370 = vmatpush1.msra.mxu0 0.0
        %1371 = vmatprep.subr.mxu0 0.0
        %1372 = vmatpush1.msra.mxu0 0.0
        %1373 = vmatprep.subr.mxu0 0.0
        %1374 = vmatpush1.msra.mxu0 0.0
        %1375 = vmatprep.subr.mxu0 0.0
        %1376 = vmatpush1.msra.mxu0 0.0
        %1377 = vmatprep.subr.mxu0 0.0
        %1378 = vmatpush1.msra.mxu0 0.0
        %1379 = vmatprep.subr.mxu0 0.0
        %1380 = vmatpush1.msra.mxu0 0.0
        %1381 = vmatprep.subr.mxu0 0.0
        %1382 = vmatpush1.msra.mxu0 0.0
        %1383 = vmatprep.subr.mxu0 0.0
        %1384 = vmatpush1.msra.mxu0 0.0
        %1385 = vmatprep.subr.mxu0 0.0
        %1386 = vmatpush1.msra.mxu0 0.0
        %1387 = vmatprep.subr.mxu0 0.0
        %1388 = vmatpush1.msra.mxu0 0.0
        %1389 = vmatprep.subr.mxu0 0.0
        %1390 = vmatpush1.msra.mxu0 0.0
        %1391 = vmatprep.subr.mxu0 0.0
        %1392 = vmatpush1.msra.mxu0 0.0
        %1393 = vmatprep.subr.mxu0 0.0
        %1394 = vmatpush1.msra.mxu0 0.0
        %1395 = vmatprep.subr.mxu0 0.0
        %1396 = vmatpush1.msra.mxu0 0.0
        %1397 = vmatprep.subr.mxu0 0.0
        %1398 = vmatpush1.msra.mxu0 0.0
        %1399 = vmatprep.subr.mxu0 0.0
        %1400 = vmatpush1.msra.mxu0 0.0
        %1401 = vmatprep.subr.mxu0 0.0
        %1402 = vmatpush1.msra.mxu0 0.0
        %1403 = vmatprep.subr.mxu0 0.0
        %1404 = vmatpush1.msra.mxu0 0.0
        %1405 = vmatprep.subr.mxu0 0.0
        %1406 = vmatpush1.msra.mxu0 0.0
        %1407 = vmatprep.subr.mxu0 0.0
        %1408 = vmatpush1.msra.mxu0 0.0
        %1409 = vmatprep.subr.mxu0 0.0
        %1410 = vmatpush1.msra.mxu0 0.0
        %1411 = vmatprep.mubr.f32.mxu0 0.0
        %1412 = vmatmul.mubr.f32.gmra.mrb[0].mxu0 %v1342
        %v1413 = vpop.f32.mrb[0].mxu0
        %v1414 = vadd.f32 0.0, %v1413
        %v1415 = vpop.f32.mrb[0].mxu0
        %1416 = vmatprep.mubr.f32.mxu0 0.0
        %1417 = vmatmul.mubr.f32.gmra.mrb[0].mxu0 %v1345
        %v1418 = vpop.f32.mrb[0].mxu0
        %v1419 = vadd.f32 0.0, %v1418
        %v1420 = vpop.f32.mrb[0].mxu0
        %1421 = vdwg.mxu0
        %v1422 = vmul.f32 %v1414, %v1333
        %v1423 = vmul.f32 %v1419, %v1334
        %1424 = vrot.lane.b32.xlu0 %v634, 32
        %v1425 = vpop.permute.xlu0 %1424
        %1426 = vrot.lane.b32.xlu0 %v635, 32
        %v1427 = vpop.permute.xlu0 %1426
        %1428 = vrot.lane.b32.xlu0 %v724, 32
        %v1429 = vpop.permute.xlu0 %1428
        %1430 = vrot.lane.b32.xlu0 %v729, 32
        %v1431 = vpop.permute.xlu0 %1430
        %v1432 = vsel %vm830, %v1425, 0
        %v1434 = vsel %vm830, %v1427, 0
        %v1436 = vsel %vm830, %v1429, 0
        %v1438 = vsel %vm830, %v1431, 0
        %1440 = vmatprep.subr.mxu0 0.0
        %1441 = vmatpush1.xpose.msra.mxu0 %v1436
        %1442 = vmatprep.subr.mxu0 0.0
        %1443 = vmatpush1.xpose.msra.mxu0 %v1438
        %1444 = vmatprep.subr.mxu0 0.0
        %1445 = vmatpush1.xpose.msra.mxu0 0.0
        %1446 = vmatprep.subr.mxu0 0.0
        %1447 = vmatpush1.xpose.msra.mxu0 0.0
        %1448 = vmatprep.subr.mxu0 0.0
        %1449 = vmatpush1.xpose.msra.mxu0 0.0
        %1450 = vmatprep.subr.mxu0 0.0
        %1451 = vmatpush1.xpose.msra.mxu0 0.0
        %1452 = vmatprep.subr.mxu0 0.0
        %1453 = vmatpush1.xpose.msra.mxu0 0.0
        %1454 = vmatprep.subr.mxu0 0.0
        %1455 = vmatpush1.xpose.msra.mxu0 0.0
        %1456 = vmatprep.subr.mxu0 0.0
        %1457 = vmatpush1.xpose.msra.mxu0 0.0
        %1458 = vmatprep.subr.mxu0 0.0
        %1459 = vmatpush1.xpose.msra.mxu0 0.0
        %1460 = vmatprep.subr.mxu0 0.0
        %1461 = vmatpush1.xpose.msra.mxu0 0.0
        %1462 = vmatprep.subr.mxu0 0.0
        %1463 = vmatpush1.xpose.msra.mxu0 0.0
        %1464 = vmatprep.subr.mxu0 0.0
        %1465 = vmatpush1.xpose.msra.mxu0 0.0
        %1466 = vmatprep.subr.mxu0 0.0
        %1467 = vmatpush1.xpose.msra.mxu0 0.0
        %1468 = vmatprep.subr.mxu0 0.0
        %1469 = vmatpush1.xpose.msra.mxu0 0.0
        %1470 = vmatprep.subr.mxu0 0.0
        %1471 = vmatpush1.xpose.msra.mxu0 0.0
        %1472 = vmatprep.subr.mxu0 0.0
        %1473 = vmatpush1.xpose.msra.mxu0 0.0
        %1474 = vmatprep.subr.mxu0 0.0
        %1475 = vmatpush1.xpose.msra.mxu0 0.0
        %1476 = vmatprep.subr.mxu0 0.0
        %1477 = vmatpush1.xpose.msra.mxu0 0.0
        %1478 = vmatprep.subr.mxu0 0.0
        %1479 = vmatpush1.xpose.msra.mxu0 0.0
        %1480 = vmatprep.subr.mxu0 0.0
        %1481 = vmatpush1.xpose.msra.mxu0 0.0
        %1482 = vmatprep.subr.mxu0 0.0
        %1483 = vmatpush1.xpose.msra.mxu0 0.0
        %1484 = vmatprep.subr.mxu0 0.0
        %1485 = vmatpush1.xpose.msra.mxu0 0.0
        %1486 = vmatprep.subr.mxu0 0.0
        %1487 = vmatpush1.xpose.msra.mxu0 0.0
        %1488 = vmatprep.subr.mxu0 0.0
        %1489 = vmatpush1.xpose.msra.mxu0 0.0
        %1490 = vmatprep.subr.mxu0 0.0
        %1491 = vmatpush1.xpose.msra.mxu0 0.0
        %1492 = vmatprep.subr.mxu0 0.0
        %1493 = vmatpush1.xpose.msra.mxu0 0.0
        %1494 = vmatprep.subr.mxu0 0.0
        %1495 = vmatpush1.xpose.msra.mxu0 0.0
        %1496 = vmatprep.subr.mxu0 0.0
        %1497 = vmatpush1.xpose.msra.mxu0 0.0
        %1498 = vmatprep.subr.mxu0 0.0
        %1499 = vmatpush1.xpose.msra.mxu0 0.0
        %1500 = vmatprep.subr.mxu0 0.0
        %1501 = vmatpush1.xpose.msra.mxu0 0.0
        %1502 = vmatprep.subr.mxu0 0.0
        %1503 = vmatpush1.xpose.msra.mxu0 0.0
        %1504 = vmatprep.mubr.f32.mxu0 0.0
        %1505 = vmatmul.mubr.f32.gmra.mrb[0].mxu0 %v1432
        %v1506 = vpop.f32.mrb[0].mxu0
        %v1507 = vadd.f32 %v828, %v1506
        %v1508 = vpop.f32.mrb[0].mxu0
        %1509 = vmatprep.mubr.f32.mxu0 0.0
        %1510 = vmatmul.mubr.f32.gmra.mrb[0].mxu0 %v1434
        %v1511 = vpop.f32.mrb[0].mxu0
        %v1512 = vadd.f32 %v829, %v1511
        %v1513 = vpop.f32.mrb[0].mxu0
        %1514 = vdwg.mxu0
        %v1515 = vsel %vm918, %v1507, -inf
        %1516 = vmax.xlane.f32.xlu0 %v1515
        %v1517 = vpop.xlane.xlu0 %1516
        %v1518 = vsel %vm918, %v1512, -inf
        %1519 = vmax.xlane.f32.xlu0 %v1518
        %v1520 = vpop.xlane.xlu0 %1519
        %v1521 = vsub.f32 %v1507, %v1517
        %v1522 = vsub.f32 %v1512, %v1520
        %v1523 = vmul.f32 %v1521, 1.442695
        %v1524 = vpow.pop %v1523
        %v1525 = vmul.f32 %v1522, 1.442695
        %v1526 = vpow.pop %v1525
        %v1527 = vsel %vm918, %v1524, 0.0
        %1528 = vadd.xlane.f32.xlu0 %v1527
        %v1529 = vpop.xlane.xlu0 %1528
        %v1530 = vsel %vm918, %v1526, 0.0
        %1531 = vadd.xlane.f32.xlu0 %v1530
        %v1532 = vpop.xlane.xlu0 %1531
        %v1533 = vrcp.pop %v1529
        %v1534 = vrcp.pop %v1532
        %1535 = vrot.lane.b32.xlu0 %v820, 32
        %v1536 = vpop.permute.xlu0 %1535
        %1537 = vrot.lane.b32.xlu0 %v825, 32
        %v1538 = vpop.permute.xlu0 %1537
        %v1542 = vsel %vm918, %v1524, 0
        %v1545 = vsel %vm918, %v1526, 0
        %1547 = vmatprep.subr.mxu0 0.0
        %1548 = vmatpush1.msra.mxu0 %v1536
        %1549 = vmatprep.subr.mxu0 0.0
        %1550 = vmatpush1.msra.mxu0 %v1538
        %1551 = vmatprep.subr.mxu0 0.0
        %1552 = vmatpush1.msra.mxu0 0.0
        %1553 = vmatprep.subr.mxu0 0.0
        %1554 = vmatpush1.msra.mxu0 0.0
        %1555 = vmatprep.subr.mxu0 0.0
        %1556 = vmatpush1.msra.mxu0 0.0
        %1557 = vmatprep.subr.mxu0 0.0
        %1558 = vmatpush1.msra.mxu0 0.0
        %1559 = vmatprep.subr.mxu0 0.0
        %1560 = vmatpush1.msra.mxu0 0.0
        %1561 = vmatprep.subr.mxu0 0.0
        %1562 = vmatpush1.msra.mxu0 0.0
        %1563 = vmatprep.subr.mxu0 0.0
        %1564 = vmatpush1.msra.mxu0 0.0
        %1565 = vmatprep.subr.mxu0 0.0
        %1566 = vmatpush1.msra.mxu0 0.0
        %1567 = vmatprep.subr.mxu0 0.0
        %1568 = vmatpush1.msra.mxu0 0.0
        %1569 = vmatprep.subr.mxu0 0.0
        %1570 = vmatpush1.msra.mxu0 0.0
        %1571 = vmatprep.subr.mxu0 0.0
        %1572 = vmatpush1.msra.mxu0 0.0
        %1573 = vmatprep.subr.mxu0 0.0
        %1574 = vmatpush1.msra.mxu0 0.0
        %1575 = vmatprep.subr.mxu0 0.0
        %1576 = vmatpush1.msra.mxu0 0.0
        %1577 = vmatprep.subr.mxu0 0.0
        %1578 = vmatpush1.msra.mxu0 0.0
        %1579 = vmatprep.subr.mxu0 0.0
        %1580 = vmatpush1.msra.mxu0 0.0
        %1581 = vmatprep.subr.mxu0 0.0
        %1582 = vmatpush1.msra.mxu0 0.0
        %1583 = vmatprep.subr.mxu0 0.0
        %1584 = vmatpush1.msra.mxu0 0.0
        %1585 = vmatprep.subr.mxu0 0.0
        %1586 = vmatpush1.msra.mxu0 0.0
        %1587 = vmatprep.subr.mxu0 0.0
        %1588 = vmatpush1.msra.mxu0 0.0
        %1589 = vmatprep.subr.mxu0 0.0
        %1590 = vmatpush1.msra.mxu0 0.0
        %1591 = vmatprep.subr.mxu0 0.0
        %1592 = vmatpush1.msra.mxu0 0.0
        %1593 = vmatprep.subr.mxu0 0.0
        %1594 = vmatpush1.msra.mxu0 0.0
        %1595 = vmatprep.subr.mxu0 0.0
        %1596 = vmatpush1.msra.mxu0 0.0
        %1597 = vmatprep.subr.mxu0 0.0
        %1598 = vmatpush1.msra.mxu0 0.0
        %1599 = vmatprep.subr.mxu0 0.0
        %1600 = vmatpush1.msra.mxu0 0.0
        %1601 = vmatprep.subr.mxu0 0.0
        %1602 = vmatpush1.msra.mxu0 0.0
        %1603 = vmatprep.subr.mxu0 0.0
        %1604 = vmatpush1.msra.mxu0 0.0
        %1605 = vmatprep.subr.mxu0 0.0
        %1606 = vmatpush1.msra.mxu0 0.0
        %1607 = vmatprep.subr.mxu0 0.0
        %1608 = vmatpush1.msra.mxu0 0.0
        %1609 = vmatprep.subr.mxu0 0.0
        %1610 = vmatpush1.msra.mxu0 0.0
        %1611 = vmatprep.mubr.f32.mxu0 0.0
        %1612 = vmatmul.mubr.f32.gmra.mrb[0].mxu0 %v1542
        %v1613 = vpop.f32.mrb[0].mxu0
        %v1614 = vadd.f32 0.0, %v1613
        %v1615 = vpop.f32.mrb[0].mxu0
        %1616 = vmatprep.mubr.f32.mxu0 0.0
        %1617 = vmatmul.mubr.f32.gmra.mrb[0].mxu0 %v1545
        %v1618 = vpop.f32.mrb[0].mxu0
        %v1619 = vadd.f32 0.0, %v1618
        %v1620 = vpop.f32.mrb[0].mxu0
        %1621 = vdwg.mxu0
        %v1622 = vmul.f32 %v1614, %v1533
        %v1623 = vmul.f32 %v1619, %v1534
        %1626 = vrot.lane.b32.xlu0 %v1222, 32
        %v1627 = vpop.permute.xlu0 %1626
        %1628 = vrot.lane.b32.xlu0 %v1223, 32
        %v1629 = vpop.permute.xlu0 %1628
        %1634 = vrot.lane.b32.xlu0 %v1422, 64
        %v1635 = vpop.permute.xlu0 %1634
        %1636 = vrot.lane.b32.xlu0 %v1423, 64
        %v1637 = vpop.permute.xlu0 %1636
        %1642 = vrot.lane.b32.xlu0 %v1622, 96
        %v1643 = vpop.permute.xlu0 %1642
        %1644 = vrot.lane.b32.xlu0 %v1623, 96
        %v1645 = vpop.permute.xlu0 %1644
        %v1648 = vsel %vm830, %v1020, %v1627
        %v1649 = vsel %vm830, %v1021, %v1629
        %v1650 = vsel %vm552, %v1648, %v1635
        %v1651 = vsel %vm552, %v1649, %v1637
        %vm1652 = vcmask 785408
        %v1653 = vsel %vm1652, %v1650, %v1643
        %v1654 = vsel %vm1652, %v1651, %v1645
        %1655 = vst [vmem:[%s525] sm:$0xff] %v1653
        %1656 = vst [vmem:[%s525 + $0x8] sm:$0xff] %v1654
        %s1657 = sand.u32 %s270, 1
        %s1658 = scalar_lea.sflag [#allocation4], %s1657
        %s1659 = sand.u32 %s270, 1
        %s1660 = smul.addr %s1659, 16
        %s1661 = scalar_lea.vmem [#allocation14], %s1660
        // Predicated region
        $region89: #{tpu_custom_call.1} parent=59 // pred_check
          %p1662 = pneg %p280
        $region90: #{tpu_custom_call.1} parent=59 // pred_check_branch
          %1664 = sbr.rel (%p1662) target = $region92
        $region91: #{tpu_custom_call.1} parent=59 // pred_region
          %s1666 = ssub.s32 256, 256
          %1667 = vsyncadd %s1658, %s1666
          %s1668 = smul.addr %s32, 2
          %s1669 = smul.addr %s1668, 128
          %s1670 = scalar_lea.hbm %s10, %s1669
          %s1671 = sshll.u32 %s1661, 4
          %s1672 = int_to_ptr.vmem [resolvable:$true] %s1671
          %1677 = dma.vmem_to_hbm [thread:$0]  %s1672, 256, %s1670, %s1658, 128, 128, 8
        $region92: #{tpu_custom_call.1} parent=59 // pred_fallthru
          _
      $region60: #{tpu_custom_call.1} parent=5 // pred_fallthru
        _
      %p1678 = scmp.le.s32.totalorder 2, %s27
      // Predicated region
      $region93: #{tpu_custom_call.1} parent=5 // pred_check
        %p1679 = pneg %p1678
      $region94: #{tpu_custom_call.1} parent=5 // pred_check_branch
        %1681 = sbr.rel (%p1679) target = $region96
      $region95: #{tpu_custom_call.1} parent=5 // pred_region
        %s1682 = ssub.s32 %s27, 2
        // Predicated region
        $region97: #{tpu_custom_call.1} parent=95 // pred_check
          %p1683 = pneg %p286
        $region98: #{tpu_custom_call.1} parent=95 // pred_check_branch
          %1685 = sbr.rel (%p1683) target = $region100
        $region99: #{tpu_custom_call.1} parent=95 // pred_region
          %s1686 = sand.u32 %s271, 1
          %s1687 = scalar_lea.sflag [#allocation4], %s1686
          %s1688 = sand.u32 %s271, 1
          %s1689 = smul.addr %s1688, 16
          %s1690 = scalar_lea.vmem [#allocation14], %s1689
          %1691 = dma.done %s1687, 256
        $region100: #{tpu_custom_call.1} parent=95 // pred_fallthru
          _
      $region96: #{tpu_custom_call.1} parent=5 // pred_fallthru
        _
    $region6: #{tpu_custom_call.1} parent=1 // loop_footer
      %s31 = sadd.s32 1, %s27
    $region7: #{tpu_custom_call.1} parent=1 // loop_footer_branch
      %26 = sbr.rel target = $region3
    $region8: #{tpu_custom_call.1} parent=1 // loop_exit
      _
    %1692 = vsyncpa [#allocation3], 1
    %s1693 = scalar_lea.sflag [#allocation3], 1
    %1694 = vsyncpa %s1693, 1
    %1695 = vsyncpa [#allocation6], 1
    %s1696 = scalar_lea.sflag [#allocation6], 1
    %1697 = vsyncpa %s1696, 1
    %1698 = vsyncpa [#allocation9], 1
    %1699 = vsyncpa [#allocation12], 1
    %1700 = vsyncpa [#allocation4], 1
    %s1701 = scalar_lea.sflag [#allocation4], 1
    %1702 = vsyncpa %s1701, 1

</llo_original>
